<compile_context>
chip_gen: v6e
topology: v6e:2x2x1
jax: 0.10.0
libtpu: 0.0.40
codegen_flags: <defaults>
</compile_context>

<pallas_src>
import functools

import jax
import jax.numpy as jnp
from jax.experimental import pallas as pl
from jax.experimental.pallas import tpu as pltpu

N_EMBED = 256          # module default
HIDDEN = 4 * N_EMBED   # 1024
DROPOUT_P = 0.2


def _round_up(a, b):
    return (a + b - 1) // b * b


def _ffn_compute(x_ref, w1_ref, b1_ref, w2_ref, b2_ref, *, mxu_dtype):
    # x_ref: (tm, D)  w1_ref: (D, H)  b1_ref: (1, H) f32
    # w2_ref: (H, D)  b2_ref: (1, D) f32
    # Matmuls run in mxu_dtype (bf16 by default -> native MXU path) with f32
    # accumulation; bias / ReLU math stays f32 on the VPU.
    h = jnp.dot(x_ref[...].astype(mxu_dtype), w1_ref[...],
                preferred_element_type=jnp.float32)
    h = jnp.maximum(h + b1_ref[...], 0.0)
    y = jnp.dot(h.astype(mxu_dtype), w2_ref[...],
                preferred_element_type=jnp.float32)
    return y + b2_ref[...]


def _ffn_kernel_eval(x_ref, w1_ref, b1_ref, w2_ref, b2_ref, o_ref, *, mxu_dtype):
    o_ref[...] = _ffn_compute(x_ref, w1_ref, b1_ref, w2_ref, b2_ref,
                              mxu_dtype=mxu_dtype).astype(o_ref.dtype)


def _ffn_kernel_train(x_ref, bits_ref, w1_ref, b1_ref, w2_ref, b2_ref, o_ref, *,
                      mxu_dtype, keep_threshold, inv_keep):
    y = _ffn_compute(x_ref, w1_ref, b1_ref, w2_ref, b2_ref, mxu_dtype=mxu_dtype)
    # Inverted dropout: keep iff bits >= p * 2^32 (pure uint32 compare, no
    # int->float convert); kept values scaled by 1/(1-p).
    keep = bits_ref[...] >= jnp.uint32(keep_threshold)
    o_ref[...] = jnp.where(keep, y * inv_keep, 0.0).astype(o_ref.dtype)


def feed_forward(x, w1, b1, w2, b2, *, training=False, rng=None, tm=512,
                 mxu_dtype=jnp.bfloat16, dropout_p=DROPOUT_P):
    """x: (B, T, D).  Returns (B, T, D) matching the module's forward pass."""
    B, T, D = x.shape
    Dw, H = w1.shape
    assert Dw == D and w2.shape == (H, D) and b1.shape == (H,) and b2.shape == (D,)
    M = B * T

    # Row tile: multiple of 8 (f32 sublane), capped so that (a) it never
    # exceeds the padded row count and (b) the grid has >= 2 tiles whenever M
    # allows, so "parallel" can shard row tiles across v7x's two TensorCores.
    tm = max(8, min(int(tm), _round_up(-(-M // 2), 8), _round_up(M, 8)))
    m_pad = _round_up(M, tm)
    grid = (m_pad // tm,)

    x2 = x.reshape(M, D)
    if m_pad != M:
        x2 = jnp.pad(x2, ((0, m_pad - M), (0, 0)))

    # Weights cast once to the MXU operand dtype (bf16 default); biases
    # converted to f32 once so the kernel has no per-step converts.
    w1c = w1.astype(mxu_dtype)
    w2c = w2.astype(mxu_dtype)
    b1_2 = b1.reshape(1, H).astype(jnp.float32)
    b2_2 = b2.reshape(1, D).astype(jnp.float32)

    in_specs = [pl.BlockSpec((tm, D), lambda i: (i, 0))]   # x rows (streamed)
    args = [x2]

    if training and dropout_p > 0.0:
        if rng is None:
            rng = jax.random.PRNGKey(0)
        # Portable dropout: uint32 keep-bits generated with jax.random in the
        # wrapper (no TPU-only PRNG primitives), streamed tile-by-tile.
        bits = jax.random.bits(rng, (m_pad, D), dtype=jnp.uint32)
        in_specs.append(pl.BlockSpec((tm, D), lambda i: (i, 0)))
        args.append(bits)
        kernel = functools.partial(
            _ffn_kernel_train, mxu_dtype=mxu_dtype,
            keep_threshold=int(round(dropout_p * 2.0 ** 32)),
            inv_keep=float(1.0 / (1.0 - dropout_p)))
    else:
        kernel = functools.partial(_ffn_kernel_eval, mxu_dtype=mxu_dtype)

    # Grid-invariant operands (constant index_map -> fetched once, VMEM-resident).
    in_specs += [
        pl.BlockSpec((D, H), lambda i: (0, 0)),   # W1
        pl.BlockSpec((1, H), lambda i: (0, 0)),   # b1 (f32)
        pl.BlockSpec((H, D), lambda i: (0, 0)),   # W2
        pl.BlockSpec((1, D), lambda i: (0, 0)),   # b2 (f32)
    ]
    args += [w1c, b1_2, w2c, b2_2]

    # VMEM budget sized from the actual tiles (x/out/bits double-buffered,
    # weights incl. their spare pipeline buffer, f32 intermediates) with 2x
    # headroom, capped at 32 MiB -> comfortably inside v7x's 64 MiB physical
    # VMEM and far below v5e/v6e's 128 MiB.
    x_item = jnp.dtype(x.dtype).itemsize
    w_item = jnp.dtype(mxu_dtype).itemsize
    vmem_bytes = (2 * 2 * tm * D * x_item          # x + out tiles, double-buffered
                  + 2 * 2 * D * H * w_item         # W1 / W2 (+ spare buffer)
                  + 2 * (H + D) * 4                # biases
                  + tm * (H + D) * 4)              # f32 hidden + y intermediates
    if training and dropout_p > 0.0:
        vmem_bytes += 2 * tm * D * 4               # uint32 bits tile
    vmem_bytes = int(min(max(2 * vmem_bytes, 8 << 20), 32 << 20))

    out2 = pl.pallas_call(
        kernel,
        out_shape=jax.ShapeDtypeStruct((m_pad, D), x.dtype),
        grid=grid,
        in_specs=in_specs,
        out_specs=pl.BlockSpec((tm, D), lambda i: (i, 0)),
        compiler_params=pltpu.CompilerParams(
            dimension_semantics=("parallel",),
            vmem_limit_bytes=vmem_bytes),
    )(*args)

    if m_pad != M:
        out2 = out2[:M]
    return out2.reshape(B, T, D)


def init_params(key, n_embed):
    """Deterministic init mimicking nn.Linear's U(-1/sqrt(fan_in), 1/sqrt(fan_in))."""
    h = 4 * n_embed
    k1, k2, k3, k4 = jax.random.split(key, 4)
    bound1 = 1.0 / jnp.sqrt(n_embed)
    bound2 = 1.0 / jnp.sqrt(h)
    # Stored as (in, out) = PyTorch nn.Linear weight.T
    w1 = jax.random.uniform(k1, (n_embed, h), jnp.float32, -bound1, bound1)
    b1 = jax.random.uniform(k2, (h,), jnp.float32, -bound1, bound1)
    w2 = jax.random.uniform(k3, (h, n_embed), jnp.float32, -bound2, bound2)
    b2 = jax.random.uniform(k4, (n_embed,), jnp.float32, -bound2, bound2)
    return w1, b1, w2, b2


if __name__ == "__main__":
    key = jax.random.PRNGKey(0)
    kx, kp, kd = jax.random.split(key, 3)

    # Small batch/seq demo shapes; feature dim is the module's n_embed=256 so
    # the kernel layout (lane-dense D=256, H=1024) matches production.
    B, T = 2, 8
    x = jax.random.normal(kx, (B, T, N_EMBED), jnp.float32)
    w1, b1, w2, b2 = init_params(kp, N_EMBED)

    # Eval-mode forward (dropout = identity).
    out = jax.block_until_ready(feed_forward(x, w1, b1, w2, b2, training=False))
    assert out.shape == (B, T, N_EMBED)

    # Pure-JAX reference with the same bf16 MXU operand rounding + f32 accum.
    xb = x.reshape(-1, N_EMBED).astype(jnp.bfloat16)
    w1b, w2b = w1.astype(jnp.bfloat16), w2.astype(jnp.bfloat16)
    h_ref = jnp.maximum(
        jnp.dot(xb, w1b, preferred_element_type=jnp.float32) + b1, 0.0)
    ref = (jnp.dot(h_ref.astype(jnp.bfloat16), w2b,
                   preferred_element_type=jnp.float32) + b2)
    ref = ref.reshape(B, T, N_EMBED)
    max_err = float(jnp.max(jnp.abs(out - ref)))
    assert max_err < 2e-2, max_err

    # Training path (inverted dropout with externally generated keep bits).
    out_tr = jax.block_until_ready(
        feed_forward(x, w1, b1, w2, b2, training=True, rng=kd))
    assert out_tr.shape == (B, T, N_EMBED)
    assert bool(jnp.all(jnp.isfinite(out_tr)))
    zero_frac = float(jnp.mean(out_tr == 0.0))
    assert 0.05 <= zero_frac <= 0.4, zero_frac   # ~20% of outputs dropped

    print("KERNEL_OK")
</pallas_src>

<mosaic_0001>
module attributes {stable_mosaic.version = 11 : i64} {
  func.func @_ffn_kernel_eval(%arg0: i32, %arg1: memref<8x256xf32, #tpu.memory_space<vmem>>, %arg2: memref<256x1024xbf16, #tpu.memory_space<vmem>>, %arg3: memref<1x1024xf32, #tpu.memory_space<vmem>>, %arg4: memref<1024x256xbf16, #tpu.memory_space<vmem>>, %arg5: memref<1x256xf32, #tpu.memory_space<vmem>>, %arg6: memref<8x256xf32, #tpu.memory_space<vmem>>) attributes {dimension_semantics = [#tpu.dimension_semantics<parallel>], iteration_bounds = array<i64: 2>, scalar_prefetch = 0 : i64, scratch_operands = 0 : i64, tpu.core_type = #tpu.core_type<tc>, window_params = [{transform_indices = @transform_0, window_bounds = array<i64: 8, 256>}, {pipeline_mode = #tpu.pipeline_mode<synchronous>, transform_indices = @transform_1, window_bounds = array<i64: 256, 1024>}, {pipeline_mode = #tpu.pipeline_mode<synchronous>, transform_indices = @transform_2, window_bounds = array<i64: 1, 1024>}, {pipeline_mode = #tpu.pipeline_mode<synchronous>, transform_indices = @transform_3, window_bounds = array<i64: 1024, 256>}, {pipeline_mode = #tpu.pipeline_mode<synchronous>, transform_indices = @transform_4, window_bounds = array<i64: 1, 256>}, {transform_indices = @transform_5, window_bounds = array<i64: 8, 256>}]} {
    %c0 = arith.constant 0 : index
    %c0_0 = arith.constant 0 : index
    %0 = vector.load %arg1[%c0, %c0_0] : memref<8x256xf32, #tpu.memory_space<vmem>>, vector<8x256xf32>
    %1 = arith.truncf %0 : vector<8x256xf32> to vector<8x256xbf16>
    %c0_1 = arith.constant 0 : index
    %c0_2 = arith.constant 0 : index
    %2 = vector.load %arg2[%c0_1, %c0_2] : memref<256x1024xbf16, #tpu.memory_space<vmem>>, vector<256x1024xbf16>
    %cst = arith.constant dense<0.000000e+00> : vector<8x1024xf32>
    %3 = tpu.matmul %1, %2, %cst {dimension_numbers = #tpu.dot_dimension_numbers<[1], [0], [0], [1], [0, 0, 1, 1], [], []>} : vector<8x256xbf16>, vector<256x1024xbf16>, vector<8x1024xf32> -> vector<8x1024xf32>
    %c0_3 = arith.constant 0 : index
    %c0_4 = arith.constant 0 : index
    %4 = vector.load %arg3[%c0_3, %c0_4] : memref<1x1024xf32, #tpu.memory_space<vmem>>, vector<1x1024xf32>
    %5 = vector.broadcast %4 : vector<1x1024xf32> to vector<8x1024xf32>
    %6 = arith.addf %3, %5 : vector<8x1024xf32>
    %cst_5 = arith.constant 0.000000e+00 : f32
    %7 = vector.broadcast %cst_5 : f32 to vector<8x1024xf32>
    %8 = arith.maximumf %6, %7 : vector<8x1024xf32>
    %9 = arith.truncf %8 : vector<8x1024xf32> to vector<8x1024xbf16>
    %c0_6 = arith.constant 0 : index
    %c0_7 = arith.constant 0 : index
    %10 = vector.load %arg4[%c0_6, %c0_7] : memref<1024x256xbf16, #tpu.memory_space<vmem>>, vector<1024x256xbf16>
    %cst_8 = arith.constant dense<0.000000e+00> : vector<8x256xf32>
    %11 = tpu.matmul %9, %10, %cst_8 {dimension_numbers = #tpu.dot_dimension_numbers<[1], [0], [0], [1], [0, 0, 1, 1], [], []>} : vector<8x1024xbf16>, vector<1024x256xbf16>, vector<8x256xf32> -> vector<8x256xf32>
    %c0_9 = arith.constant 0 : index
    %c0_10 = arith.constant 0 : index
    %12 = vector.load %arg5[%c0_9, %c0_10] : memref<1x256xf32, #tpu.memory_space<vmem>>, vector<1x256xf32>
    %13 = vector.broadcast %12 : vector<1x256xf32> to vector<8x256xf32>
    %14 = arith.addf %11, %13 : vector<8x256xf32>
    %c0_11 = arith.constant 0 : index
    %c0_12 = arith.constant 0 : index
    %15 = vector.load %arg6[%c0_11, %c0_12] : memref<8x256xf32, #tpu.memory_space<vmem>>, vector<8x256xf32>
    tpu.vector_store %arg6[%c0_11, %c0_12], %14 {strides = array<i32>} : memref<8x256xf32, #tpu.memory_space<vmem>>, vector<8x256xf32>,
    return
  }
  func.func @transform_0(%arg0: i32) -> (i32, i32) {
    %c0_i32 = arith.constant 0 : i32
    %c0_i32_0 = arith.constant 0 : i32
    return %arg0, %c0_i32 : i32, i32
  }
  func.func @transform_1(%arg0: i32) -> (i32, i32) {
    %c0_i32 = arith.constant 0 : i32
    %c0_i32_0 = arith.constant 0 : i32
    %c0_i32_1 = arith.constant 0 : i32
    return %c0_i32, %c0_i32_0 : i32, i32
  }
  func.func @transform_2(%arg0: i32) -> (i32, i32) {
    %c0_i32 = arith.constant 0 : i32
    %c0_i32_0 = arith.constant 0 : i32
    %c0_i32_1 = arith.constant 0 : i32
    return %c0_i32, %c0_i32_0 : i32, i32
  }
  func.func @transform_3(%arg0: i32) -> (i32, i32) {
    %c0_i32 = arith.constant 0 : i32
    %c0_i32_0 = arith.constant 0 : i32
    %c0_i32_1 = arith.constant 0 : i32
    return %c0_i32, %c0_i32_0 : i32, i32
  }
  func.func @transform_4(%arg0: i32) -> (i32, i32) {
    %c0_i32 = arith.constant 0 : i32
    %c0_i32_0 = arith.constant 0 : i32
    %c0_i32_1 = arith.constant 0 : i32
    return %c0_i32, %c0_i32_0 : i32, i32
  }
  func.func @transform_5(%arg0: i32) -> (i32, i32) {
    %c0_i32 = arith.constant 0 : i32
    %c0_i32_0 = arith.constant 0 : i32
    return %arg0, %c0_i32 : i32, i32
  }
}

</mosaic_0001>

<llo_original>
// kernel: tpu_custom_call.1
$region0: #{tpu_custom_call.1}
  #allocation0 [shape = 'u32[]', space=smem, size = 0x4, offset = 0x4, fixed_abs, tag = 'smem constant byte address 0x4 - core index']
  #allocation1 [shape = 'u32[144,128]{1,0:T(1,128)}', space=vmem, size = 0x12000, scoped, tag = 'internal scratch']
  %s0 = inlined_call_operand.hbm [shape: f32[16,256], index: 0, kind: input, shape index: {}]
  %s1 = inlined_call_operand.hbm [shape: bf16[256,1024], index: 1, kind: input, shape index: {}]
  %s2 = inlined_call_operand.hbm [shape: f32[1,1024], index: 2, kind: input, shape index: {}]
  %s3 = inlined_call_operand.hbm [shape: bf16[1024,256], index: 3, kind: input, shape index: {}]
  %s4 = inlined_call_operand.vmem [shape: f32[1,256], index: 4, kind: input, shape index: {}]
  %s5 = inlined_call_operand.hbm [shape: f32[16,256], index: 5, kind: output, shape index: {}]
  %s6 = sld [smem:[#allocation0]]
  $region69: #{tpu_custom_call.1} parent=0
    _
  %s8 = ssub.s32 1, %s6
  %s9 = scalar_select 0, %s8, %s6
  $region1: #{tpu_custom_call.1} parent=0
    #allocation2 [shape = 'u8[16384]{0}', space=vmem, size = 0x4000, scoped, tag = 'input window, operand 0']
    #allocation3 [shape = 's32[2]{0}', space=sflag, size = 0x8, scoped, tag = 'scoped memory for tpu_custom_call.1']
    #allocation4 [shape = 's32[2]{0}', space=sflag, size = 0x8, scoped, tag = 'scoped memory for tpu_custom_call.1']
    #allocation5 [shape = 'u8[524288]{0}', space=vmem, size = 0x80000, scoped, tag = 'input window, operand 1, single buffered']
    #allocation6 [shape = 's32[1]{0}', space=sflag, size = 0x4, scoped, tag = 'scoped memory for tpu_custom_call.1']
    #allocation7 [shape = 'u8[4096]{0}', space=vmem, size = 0x1000, scoped, tag = 'input window, operand 2, single buffered']
    #allocation8 [shape = 'u8[524288]{0}', space=vmem, size = 0x80000, scoped, tag = 'input window, operand 3, single buffered']
    #allocation9 [shape = 's32[1]{0}', space=sflag, size = 0x4, scoped, tag = 'scoped memory for tpu_custom_call.1']
    #allocation10 [shape = 'u8[16384]{0}', space=vmem, size = 0x4000, scoped, tag = 'output window, operand 0']
    %10 = vsyncpa [#allocation3], 0
    %s11 = scalar_lea.sflag [#allocation3], 1
    %12 = vsyncpa %s11, 0
    %13 = vsyncpa [#allocation6], 0
    %14 = vsyncpa [#allocation9], 0
    %15 = vsyncpa [#allocation4], 0
    %s16 = scalar_lea.sflag [#allocation4], 1
    %17 = vsyncpa %s16, 0
    loop: start=0, step=1, limit=4
    $region2: #{tpu_custom_call.1} parent=1 // loop_pre_header
      _
    $region3: #{tpu_custom_call.1} parent=1 // loop_header
      %s19 = sphi 0, %s23
      %p20 = scmp.ge.s32.totalorder %s19, 4
      %s29 = sphi 0, %s31
      %s32 = sphi 0, %s29
      %s33 = sphi 0, %s32
      %s49 = sphi 0, %s33
      %s53 = sphi 0, %s53
      %s55 = sphi 0, %s53
      %s56 = sphi 0, %s55
      %s70 = sphi 0, %s56
      %s74 = sphi 0, %s74
      %s76 = sphi 0, %s74
      %s77 = sphi 0, %s76
      %s91 = sphi 0, %s77
      %s95 = sphi 0, %s95
      %s97 = sphi 0, %s95
      %s98 = sphi 0, %s97
      %s112 = sphi 0, %s98
      %s116 = sphi 0, %s116
      %s118 = sphi 0, %s116
      %s119 = sphi 0, %s118
      %s133 = sphi 0, %s119
      %s139 = sphi 0, %s141
      %s142 = sphi 0, %s139
      %s143 = sphi 0, %s142
      %s159 = sphi 0, %s143
    $region4: #{tpu_custom_call.1} parent=1 // loop_header_branch
      %22 = sbr.rel (%p20) target = $region8
    $region5: #{tpu_custom_call.1} parent=1 // loop_body
      %s24 = ssub.s32 %s19, 1
      %s25 = ssub.s32 %s19, 2
      %s26 = sadd.s32 %s19, 1
      %s27 = ssub.s32 %s19, %s26
      %p28 = scmp.eq.s32.totalorder %s27, 0
      %s30 = sadd.s32 %s29, 1
      %s31 = scalar_select %p28, %s29, %s30
      %p34 = pneg %p28
      %p35 = scmp.eq.s32.totalorder %s19, 1
      %p36 = por %p34, %p35
      %p37 = scmp.ne.s32.totalorder %s29, %s32
      %p38 = scmp.eq.s32.totalorder %s19, 0
      %p39 = por %p37, %p38
      %p40 = scmp.ne.s32.totalorder %s29, %s32
      %p41 = scmp.eq.s32.totalorder %s24, 1
      %p42 = por %p40, %p41
      %p43 = scmp.ne.s32.totalorder %s32, %s33
      %p44 = scmp.eq.s32.totalorder %s24, 0
      %p45 = por %p43, %p44
      %p46 = scmp.ne.s32.totalorder %s32, %s33
      %p47 = scmp.eq.s32.totalorder %s25, 1
      %p48 = por %p46, %p47
      %p50 = scmp.ne.s32.totalorder %s33, %s49
      %p51 = scmp.eq.s32.totalorder %s25, 0
      %p52 = por %p50, %p51
      %s54 = sadd.s32 %s53, 1
      %p57 = scmp.eq.s32.totalorder %s19, 1
      %p58 = scmp.ne.s32.totalorder %s53, %s55
      %p59 = scmp.eq.s32.totalorder %s19, 0
      %p60 = por %p58, %p59
      %p61 = scmp.ne.s32.totalorder %s53, %s55
      %p62 = scmp.eq.s32.totalorder %s24, 1
      %p63 = por %p61, %p62
      %p64 = scmp.ne.s32.totalorder %s55, %s56
      %p65 = scmp.eq.s32.totalorder %s24, 0
      %p66 = por %p64, %p65
      %p67 = scmp.ne.s32.totalorder %s55, %s56
      %p68 = scmp.eq.s32.totalorder %s25, 1
      %p69 = por %p67, %p68
      %p71 = scmp.ne.s32.totalorder %s56, %s70
      %p72 = scmp.eq.s32.totalorder %s25, 0
      %p73 = por %p71, %p72
      %s75 = sadd.s32 %s74, 1
      %p78 = scmp.eq.s32.totalorder %s19, 1
      %p79 = scmp.ne.s32.totalorder %s74, %s76
      %p80 = scmp.eq.s32.totalorder %s19, 0
      %p81 = por %p79, %p80
      %p82 = scmp.ne.s32.totalorder %s74, %s76
      %p83 = scmp.eq.s32.totalorder %s24, 1
      %p84 = por %p82, %p83
      %p85 = scmp.ne.s32.totalorder %s76, %s77
      %p86 = scmp.eq.s32.totalorder %s24, 0
      %p87 = por %p85, %p86
      %p88 = scmp.ne.s32.totalorder %s76, %s77
      %p89 = scmp.eq.s32.totalorder %s25, 1
      %p90 = por %p88, %p89
      %p92 = scmp.ne.s32.totalorder %s77, %s91
      %p93 = scmp.eq.s32.totalorder %s25, 0
      %p94 = por %p92, %p93
      %s96 = sadd.s32 %s95, 1
      %p99 = scmp.eq.s32.totalorder %s19, 1
      %p100 = scmp.ne.s32.totalorder %s95, %s97
      %p101 = scmp.eq.s32.totalorder %s19, 0
      %p102 = por %p100, %p101
      %p103 = scmp.ne.s32.totalorder %s95, %s97
      %p104 = scmp.eq.s32.totalorder %s24, 1
      %p105 = por %p103, %p104
      %p106 = scmp.ne.s32.totalorder %s97, %s98
      %p107 = scmp.eq.s32.totalorder %s24, 0
      %p108 = por %p106, %p107
      %p109 = scmp.ne.s32.totalorder %s97, %s98
      %p110 = scmp.eq.s32.totalorder %s25, 1
      %p111 = por %p109, %p110
      %p113 = scmp.ne.s32.totalorder %s98, %s112
      %p114 = scmp.eq.s32.totalorder %s25, 0
      %p115 = por %p113, %p114
      %s117 = sadd.s32 %s116, 1
      %p120 = scmp.eq.s32.totalorder %s19, 1
      %p121 = scmp.ne.s32.totalorder %s116, %s118
      %p122 = scmp.eq.s32.totalorder %s19, 0
      %p123 = por %p121, %p122
      %p124 = scmp.ne.s32.totalorder %s116, %s118
      %p125 = scmp.eq.s32.totalorder %s24, 1
      %p126 = por %p124, %p125
      %p127 = scmp.ne.s32.totalorder %s118, %s119
      %p128 = scmp.eq.s32.totalorder %s24, 0
      %p129 = por %p127, %p128
      %p130 = scmp.ne.s32.totalorder %s118, %s119
      %p131 = scmp.eq.s32.totalorder %s25, 1
      %p132 = por %p130, %p131
      %p134 = scmp.ne.s32.totalorder %s119, %s133
      %p135 = scmp.eq.s32.totalorder %s25, 0
      %p136 = por %p134, %p135
      %s137 = ssub.s32 %s19, %s26
      %p138 = scmp.eq.s32.totalorder %s137, 0
      %s140 = sadd.s32 %s139, 1
      %s141 = scalar_select %p138, %s139, %s140
      %p144 = pneg %p138
      %p145 = scmp.eq.s32.totalorder %s19, 1
      %p146 = por %p144, %p145
      %p147 = scmp.ne.s32.totalorder %s139, %s142
      %p148 = scmp.eq.s32.totalorder %s19, 0
      %p149 = por %p147, %p148
      %p150 = scmp.ne.s32.totalorder %s139, %s142
      %p151 = scmp.eq.s32.totalorder %s24, 1
      %p152 = por %p150, %p151
      %p153 = scmp.ne.s32.totalorder %s142, %s143
      %p154 = scmp.eq.s32.totalorder %s24, 0
      %p155 = por %p153, %p154
      %p156 = scmp.ne.s32.totalorder %s142, %s143
      %p157 = scmp.eq.s32.totalorder %s25, 1
      %p158 = por %p156, %p157
      %p160 = scmp.ne.s32.totalorder %s143, %s159
      %p161 = scmp.eq.s32.totalorder %s25, 0
      %p162 = por %p160, %p161
      %p163 = scmp.le.s32.totalorder 1, %s19
      %p164 = scmp.lt.s32.totalorder %s19, 3
      %p165 = pnand %p163, %p164
      %p166 = pneg %p165
      // Predicated region
      $region9: #{tpu_custom_call.1} parent=5 // pred_check
        _
      $region10: #{tpu_custom_call.1} parent=5 // pred_check_branch
        %168 = sbr.rel (%p165) target = $region12
      $region11: #{tpu_custom_call.1} parent=5 // pred_region
        %s169 = ssub.s32 %s19, 1
        // Predicated region
        $region13: #{tpu_custom_call.1} parent=11 // pred_check
          %p170 = pneg %p66
        $region14: #{tpu_custom_call.1} parent=11 // pred_check_branch
          %172 = sbr.rel (%p170) target = $region16
        $region15: #{tpu_custom_call.1} parent=11 // pred_region
          %s174 = ssub.s32 16384, 16384
          %175 = vsyncadd [#allocation6], %s174
          %s176 = sshll.u32 [#allocation5], 4
          %s177 = int_to_ptr.vmem [resolvable:$true] %s176
          %182 = dma.hbm_to_vmem [thread:$0]  %s1, 16384, %s177, [#allocation6], 512, 512, 32
        $region16: #{tpu_custom_call.1} parent=11 // pred_fallthru
          _
        // Predicated region
        $region17: #{tpu_custom_call.1} parent=11 // pred_check
          %p183 = pneg %p87
        $region18: #{tpu_custom_call.1} parent=11 // pred_check_branch
          %185 = sbr.rel (%p183) target = $region20
        $region19: #{tpu_custom_call.1} parent=11 // pred_region
          %s187 = ssub.s32 128, 128
          %188 = vsyncadd [#allocation6], %s187
          %s190 = sshll.u32 [#allocation7], 4
          %s191 = int_to_ptr.vmem [resolvable:$true] %s190
          %193 = dma.hbm_to_vmem [thread:$0]  %s2, 128, %s191, [#allocation6]
        $region20: #{tpu_custom_call.1} parent=11 // pred_fallthru
          _
        // Predicated region
        $region21: #{tpu_custom_call.1} parent=11 // pred_check
          %p194 = pneg %p108
        $region22: #{tpu_custom_call.1} parent=11 // pred_check_branch
          %196 = sbr.rel (%p194) target = $region24
        $region23: #{tpu_custom_call.1} parent=11 // pred_region
          %s198 = ssub.s32 16384, 16384
          %199 = vsyncadd [#allocation9], %s198
          %s200 = sshll.u32 [#allocation8], 4
          %s201 = int_to_ptr.vmem [resolvable:$true] %s200
          %206 = dma.hbm_to_vmem [thread:$0]  %s3, 16384, %s201, [#allocation9], 128, 128, 8
        $region24: #{tpu_custom_call.1} parent=11 // pred_fallthru
          _
        // Predicated region
        $region25: #{tpu_custom_call.1} parent=11 // pred_check
          %p207 = pneg %p129
        $region26: #{tpu_custom_call.1} parent=11 // pred_check_branch
          %209 = sbr.rel (%p207) target = $region28
        $region27: #{tpu_custom_call.1} parent=11 // pred_region
          _
        $region28: #{tpu_custom_call.1} parent=11 // pred_fallthru
          _
      $region12: #{tpu_custom_call.1} parent=5 // pred_fallthru
        _
      %p210 = scmp.lt.s32.totalorder %s19, 2
      // Predicated region
      $region29: #{tpu_custom_call.1} parent=5 // pred_check
        %p211 = pneg %p210
      $region30: #{tpu_custom_call.1} parent=5 // pred_check_branch
        %213 = sbr.rel (%p211) target = $region32
      $region31: #{tpu_custom_call.1} parent=5 // pred_region
        // Predicated region
        $region33: #{tpu_custom_call.1} parent=31 // pred_check
          %p214 = pneg %p39
        $region34: #{tpu_custom_call.1} parent=31 // pred_check_branch
          %216 = sbr.rel (%p214) target = $region36
        $region35: #{tpu_custom_call.1} parent=31 // pred_region
          %s217 = sand.u32 %s29, 1
          %s218 = scalar_lea.sflag [#allocation3], %s217
          %s219 = sand.u32 %s29, 1
          %s220 = smul.addr %s219, 16
          %s221 = scalar_lea.vmem [#allocation2], %s220
          %s223 = ssub.s32 256, 256
          %224 = vsyncadd %s218, %s223
          %s225 = smul.addr %s19, 2
          %s226 = smul.addr %s225, 128
          %s227 = scalar_lea.hbm %s0, %s226
          %s229 = sshll.u32 %s221, 4
          %s230 = int_to_ptr.vmem [resolvable:$true] %s229
          %232 = dma.hbm_to_vmem [thread:$0]  %s227, 256, %s230, %s218
        $region36: #{tpu_custom_call.1} parent=31 // pred_fallthru
          _
      $region32: #{tpu_custom_call.1} parent=5 // pred_fallthru
        _
      %p233 = scmp.le.s32.totalorder 1, %s19
      %p234 = scmp.lt.s32.totalorder %s19, 3
      %p235 = pnand %p233, %p234
      %p236 = pneg %p235
      // Predicated region
      $region37: #{tpu_custom_call.1} parent=5 // pred_check
        _
      $region38: #{tpu_custom_call.1} parent=5 // pred_check_branch
        %238 = sbr.rel (%p235) target = $region40
      $region39: #{tpu_custom_call.1} parent=5 // pred_region
        %s239 = ssub.s32 %s19, 1
        %s240 = sand.u32 %s32, 1
        %s241 = scalar_lea.sflag [#allocation3], %s240
        %s242 = sand.u32 %s32, 1
        %s243 = smul.addr %s242, 16
        %s244 = scalar_lea.vmem [#allocation2], %s243
        // Predicated region
        $region41: #{tpu_custom_call.1} parent=39 // pred_check
          %p245 = pneg %p45
        $region42: #{tpu_custom_call.1} parent=39 // pred_check_branch
          %247 = sbr.rel (%p245) target = $region44
        $region43: #{tpu_custom_call.1} parent=39 // pred_region
          %248 = dma.done %s241, 256
        $region44: #{tpu_custom_call.1} parent=39 // pred_fallthru
          _
        // Predicated region
        $region45: #{tpu_custom_call.1} parent=39 // pred_check
          %p249 = pneg %p66
        $region46: #{tpu_custom_call.1} parent=39 // pred_check_branch
          %251 = sbr.rel (%p249) target = $region48
        $region47: #{tpu_custom_call.1} parent=39 // pred_region
          %252 = dma.done [#allocation6], 16384
        $region48: #{tpu_custom_call.1} parent=39 // pred_fallthru
          _
        // Predicated region
        $region49: #{tpu_custom_call.1} parent=39 // pred_check
          %p253 = pneg %p87
        $region50: #{tpu_custom_call.1} parent=39 // pred_check_branch
          %255 = sbr.rel (%p253) target = $region52
        $region51: #{tpu_custom_call.1} parent=39 // pred_region
          %256 = dma.done [#allocation6], 128
        $region52: #{tpu_custom_call.1} parent=39 // pred_fallthru
          _
        // Predicated region
        $region53: #{tpu_custom_call.1} parent=39 // pred_check
          %p257 = pneg %p108
        $region54: #{tpu_custom_call.1} parent=39 // pred_check_branch
          %259 = sbr.rel (%p257) target = $region56
        $region55: #{tpu_custom_call.1} parent=39 // pred_region
          %260 = dma.done [#allocation9], 16384
        $region56: #{tpu_custom_call.1} parent=39 // pred_fallthru
          _
        %s261 = sand.u32 %s32, 1
        %s262 = scalar_lea.sflag [#allocation3], %s261
        %s263 = sand.u32 %s32, 1
        %s264 = smul.addr %s263, 16
        %s265 = scalar_lea.vmem [#allocation2], %s264
        %p266 = pneg %p45
        %p267 = pneg %p42
        %p268 = pneg %p66
        %p269 = pneg %p63
        %p270 = pneg %p87
        %p271 = pneg %p84
        %p272 = pneg %p108
        %p273 = pneg %p105
        %p274 = pneg %p129
        %p275 = pneg %p126
        %p276 = pneg %p155
        %p277 = pneg %p152
        %s278 = sand.u32 %s142, 1
        %s279 = scalar_lea.sflag [#allocation4], %s278
        %s280 = sand.u32 %s142, 1
        %s281 = smul.addr %s280, 16
        %s282 = scalar_lea.vmem [#allocation10], %s281
        %v283 = vld [vmem:[%s244] sm:$0xff]
        %v284 = vld [vmem:[%s244 + $0x8] sm:$0xff]
        %v285 = vpack.c.bf16 %v283, %v283
        %v286 = vpack.c.bf16 %v284, %v284
        %v287 = vld [vmem:[#allocation5] sm:$0xff]
        %v288 = vld [vmem:[#allocation5 + $0x8] sm:$0xff]
        %v289 = vld [vmem:[#allocation5 + $0x10] sm:$0xff]
        %v290 = vld [vmem:[#allocation5 + $0x18] sm:$0xff]
        %v291 = vld [vmem:[#allocation5 + $0x20] sm:$0xff]
        %v292 = vld [vmem:[#allocation5 + $0x28] sm:$0xff]
        %v293 = vld [vmem:[#allocation5 + $0x30] sm:$0xff]
        %v294 = vld [vmem:[#allocation5 + $0x38] sm:$0xff]
        %v295 = vld [vmem:[#allocation5 + $0x40] sm:$0xff]
        %v296 = vld [vmem:[#allocation5 + $0x48] sm:$0xff]
        %v297 = vld [vmem:[#allocation5 + $0x50] sm:$0xff]
        %v298 = vld [vmem:[#allocation5 + $0x58] sm:$0xff]
        %v299 = vld [vmem:[#allocation5 + $0x60] sm:$0xff]
        %v300 = vld [vmem:[#allocation5 + $0x68] sm:$0xff]
        %v301 = vld [vmem:[#allocation5 + $0x70] sm:$0xff]
        %v302 = vld [vmem:[#allocation5 + $0x78] sm:$0xff]
        %v303 = vld [vmem:[#allocation5 + $0x80] sm:$0xff]
        %v304 = vld [vmem:[#allocation5 + $0x88] sm:$0xff]
        %v305 = vld [vmem:[#allocation5 + $0x90] sm:$0xff]
        %v306 = vld [vmem:[#allocation5 + $0x98] sm:$0xff]
        %v307 = vld [vmem:[#allocation5 + $0xa0] sm:$0xff]
        %v308 = vld [vmem:[#allocation5 + $0xa8] sm:$0xff]
        %v309 = vld [vmem:[#allocation5 + $0xb0] sm:$0xff]
        %v310 = vld [vmem:[#allocation5 + $0xb8] sm:$0xff]
        %v311 = vld [vmem:[#allocation5 + $0xc0] sm:$0xff]
        %v312 = vld [vmem:[#allocation5 + $0xc8] sm:$0xff]
        %v313 = vld [vmem:[#allocation5 + $0xd0] sm:$0xff]
        %v314 = vld [vmem:[#allocation5 + $0xd8] sm:$0xff]
        %v315 = vld [vmem:[#allocation5 + $0xe0] sm:$0xff]
        %v316 = vld [vmem:[#allocation5 + $0xe8] sm:$0xff]
        %v317 = vld [vmem:[#allocation5 + $0xf0] sm:$0xff]
        %v318 = vld [vmem:[#allocation5 + $0xf8] sm:$0xff]
        %v319 = vld [vmem:[#allocation5 + $0x100] sm:$0xff]
        %v320 = vld [vmem:[#allocation5 + $0x108] sm:$0xff]
        %v321 = vld [vmem:[#allocation5 + $0x110] sm:$0xff]
        %v322 = vld [vmem:[#allocation5 + $0x118] sm:$0xff]
        %v323 = vld [vmem:[#allocation5 + $0x120] sm:$0xff]
        %v324 = vld [vmem:[#allocation5 + $0x128] sm:$0xff]
        %v325 = vld [vmem:[#allocation5 + $0x130] sm:$0xff]
        %v326 = vld [vmem:[#allocation5 + $0x138] sm:$0xff]
        %v327 = vld [vmem:[#allocation5 + $0x140] sm:$0xff]
        %v328 = vld [vmem:[#allocation5 + $0x148] sm:$0xff]
        %v329 = vld [vmem:[#allocation5 + $0x150] sm:$0xff]
        %v330 = vld [vmem:[#allocation5 + $0x158] sm:$0xff]
        %v331 = vld [vmem:[#allocation5 + $0x160] sm:$0xff]
        %v332 = vld [vmem:[#allocation5 + $0x168] sm:$0xff]
        %v333 = vld [vmem:[#allocation5 + $0x170] sm:$0xff]
        %v334 = vld [vmem:[#allocation5 + $0x178] sm:$0xff]
        %v335 = vld [vmem:[#allocation5 + $0x180] sm:$0xff]
        %v336 = vld [vmem:[#allocation5 + $0x188] sm:$0xff]
        %v337 = vld [vmem:[#allocation5 + $0x190] sm:$0xff]
        %v338 = vld [vmem:[#allocation5 + $0x198] sm:$0xff]
        %v339 = vld [vmem:[#allocation5 + $0x1a0] sm:$0xff]
        %v340 = vld [vmem:[#allocation5 + $0x1a8] sm:$0xff]
        %v341 = vld [vmem:[#allocation5 + $0x1b0] sm:$0xff]
        %v342 = vld [vmem:[#allocation5 + $0x1b8] sm:$0xff]
        %v343 = vld [vmem:[#allocation5 + $0x1c0] sm:$0xff]
        %v344 = vld [vmem:[#allocation5 + $0x1c8] sm:$0xff]
        %v345 = vld [vmem:[#allocation5 + $0x1d0] sm:$0xff]
        %v346 = vld [vmem:[#allocation5 + $0x1d8] sm:$0xff]
        %v347 = vld [vmem:[#allocation5 + $0x1e0] sm:$0xff]
        %v348 = vld [vmem:[#allocation5 + $0x1e8] sm:$0xff]
        %v349 = vld [vmem:[#allocation5 + $0x1f0] sm:$0xff]
        %v350 = vld [vmem:[#allocation5 + $0x1f8] sm:$0xff]
        %v351 = vld [vmem:[#allocation5 + $0x200] sm:$0xff]
        %v352 = vld [vmem:[#allocation5 + $0x208] sm:$0xff]
        %v353 = vld [vmem:[#allocation5 + $0x210] sm:$0xff]
        %v354 = vld [vmem:[#allocation5 + $0x218] sm:$0xff]
        %v355 = vld [vmem:[#allocation5 + $0x220] sm:$0xff]
        %v356 = vld [vmem:[#allocation5 + $0x228] sm:$0xff]
        %v357 = vld [vmem:[#allocation5 + $0x230] sm:$0xff]
        %v358 = vld [vmem:[#allocation5 + $0x238] sm:$0xff]
        %v359 = vld [vmem:[#allocation5 + $0x240] sm:$0xff]
        %v360 = vld [vmem:[#allocation5 + $0x248] sm:$0xff]
        %v361 = vld [vmem:[#allocation5 + $0x250] sm:$0xff]
        %v362 = vld [vmem:[#allocation5 + $0x258] sm:$0xff]
        %v363 = vld [vmem:[#allocation5 + $0x260] sm:$0xff]
        %v364 = vld [vmem:[#allocation5 + $0x268] sm:$0xff]
        %v365 = vld [vmem:[#allocation5 + $0x270] sm:$0xff]
        %v366 = vld [vmem:[#allocation5 + $0x278] sm:$0xff]
        %v367 = vld [vmem:[#allocation5 + $0x280] sm:$0xff]
        %v368 = vld [vmem:[#allocation5 + $0x288] sm:$0xff]
        %v369 = vld [vmem:[#allocation5 + $0x290] sm:$0xff]
        %v370 = vld [vmem:[#allocation5 + $0x298] sm:$0xff]
        %v371 = vld [vmem:[#allocation5 + $0x2a0] sm:$0xff]
        %v372 = vld [vmem:[#allocation5 + $0x2a8] sm:$0xff]
        %v373 = vld [vmem:[#allocation5 + $0x2b0] sm:$0xff]
        %v374 = vld [vmem:[#allocation5 + $0x2b8] sm:$0xff]
        %v375 = vld [vmem:[#allocation5 + $0x2c0] sm:$0xff]
        %v376 = vld [vmem:[#allocation5 + $0x2c8] sm:$0xff]
        %v377 = vld [vmem:[#allocation5 + $0x2d0] sm:$0xff]
        %v378 = vld [vmem:[#allocation5 + $0x2d8] sm:$0xff]
        %v379 = vld [vmem:[#allocation5 + $0x2e0] sm:$0xff]
        %v380 = vld [vmem:[#allocation5 + $0x2e8] sm:$0xff]
        %v381 = vld [vmem:[#allocation5 + $0x2f0] sm:$0xff]
        %v382 = vld [vmem:[#allocation5 + $0x2f8] sm:$0xff]
        %v383 = vld [vmem:[#allocation5 + $0x300] sm:$0xff]
        %v384 = vld [vmem:[#allocation5 + $0x308] sm:$0xff]
        %v385 = vld [vmem:[#allocation5 + $0x310] sm:$0xff]
        %v386 = vld [vmem:[#allocation5 + $0x318] sm:$0xff]
        %v387 = vld [vmem:[#allocation5 + $0x320] sm:$0xff]
        %v388 = vld [vmem:[#allocation5 + $0x328] sm:$0xff]
        %v389 = vld [vmem:[#allocation5 + $0x330] sm:$0xff]
        %v390 = vld [vmem:[#allocation5 + $0x338] sm:$0xff]
        %v391 = vld [vmem:[#allocation5 + $0x340] sm:$0xff]
        %v392 = vld [vmem:[#allocation5 + $0x348] sm:$0xff]
        %v393 = vld [vmem:[#allocation5 + $0x350] sm:$0xff]
        %v394 = vld [vmem:[#allocation5 + $0x358] sm:$0xff]
        %v395 = vld [vmem:[#allocation5 + $0x360] sm:$0xff]
        %v396 = vld [vmem:[#allocation5 + $0x368] sm:$0xff]
        %v397 = vld [vmem:[#allocation5 + $0x370] sm:$0xff]
        %v398 = vld [vmem:[#allocation5 + $0x378] sm:$0xff]
        %v399 = vld [vmem:[#allocation5 + $0x380] sm:$0xff]
        %v400 = vld [vmem:[#allocation5 + $0x388] sm:$0xff]
        %v401 = vld [vmem:[#allocation5 + $0x390] sm:$0xff]
        %v402 = vld [vmem:[#allocation5 + $0x398] sm:$0xff]
        %v403 = vld [vmem:[#allocation5 + $0x3a0] sm:$0xff]
        %v404 = vld [vmem:[#allocation5 + $0x3a8] sm:$0xff]
        %v405 = vld [vmem:[#allocation5 + $0x3b0] sm:$0xff]
        %v406 = vld [vmem:[#allocation5 + $0x3b8] sm:$0xff]
        %v407 = vld [vmem:[#allocation5 + $0x3c0] sm:$0xff]
        %v408 = vld [vmem:[#allocation5 + $0x3c8] sm:$0xff]
        %v409 = vld [vmem:[#allocation5 + $0x3d0] sm:$0xff]
        %v410 = vld [vmem:[#allocation5 + $0x3d8] sm:$0xff]
        %v411 = vld [vmem:[#allocation5 + $0x3e0] sm:$0xff]
        %v412 = vld [vmem:[#allocation5 + $0x3e8] sm:$0xff]
        %v413 = vld [vmem:[#allocation5 + $0x3f0] sm:$0xff]
        %v414 = vld [vmem:[#allocation5 + $0x3f8] sm:$0xff]
        %v415 = vld [vmem:[#allocation7] sm:$0xff]
        %v417 = vlaneseq
        %v418 = vshrl.u32 %v417, 7
        %v419 = vsub.s32 0, %v418
        %v420 = vrot.slane %v415, %v419
        %v421 = vlaneseq
        %v422 = vshrl.u32 %v421, 7
        %v423 = vsub.s32 1, %v422
        %v424 = vrot.slane %v415, %v423
        %v425 = vlaneseq
        %v426 = vshrl.u32 %v425, 7
        %v427 = vsub.s32 2, %v426
        %v428 = vrot.slane %v415, %v427
        %v429 = vlaneseq
        %v430 = vshrl.u32 %v429, 7
        %v431 = vsub.s32 3, %v430
        %v432 = vrot.slane %v415, %v431
        %v433 = vlaneseq
        %v434 = vshrl.u32 %v433, 7
        %v435 = vsub.s32 4, %v434
        %v436 = vrot.slane %v415, %v435
        %v437 = vlaneseq
        %v438 = vshrl.u32 %v437, 7
        %v439 = vsub.s32 5, %v438
        %v440 = vrot.slane %v415, %v439
        %v441 = vlaneseq
        %v442 = vshrl.u32 %v441, 7
        %v443 = vsub.s32 6, %v442
        %v444 = vrot.slane %v415, %v443
        %v445 = vlaneseq
        %v446 = vshrl.u32 %v445, 7
        %v447 = vsub.s32 7, %v446
        %v448 = vrot.slane %v415, %v447
        %v585 = vunpack.c.l.b16 %v287
        %v586 = vunpack.c.h.b16 %v287
        %v587 = vunpack.c.l.b16 %v288
        %v588 = vunpack.c.h.b16 %v288
        %v589 = vunpack.c.l.b16 %v289
        %v590 = vunpack.c.h.b16 %v289
        %v591 = vunpack.c.l.b16 %v290
        %v592 = vunpack.c.h.b16 %v290
        %v593 = vunpack.c.l.b16 %v291
        %v594 = vunpack.c.h.b16 %v291
        %v595 = vunpack.c.l.b16 %v292
        %v596 = vunpack.c.h.b16 %v292
        %v597 = vunpack.c.l.b16 %v293
        %v598 = vunpack.c.h.b16 %v293
        %v599 = vunpack.c.l.b16 %v294
        %v600 = vunpack.c.h.b16 %v294
        %v601 = vunpack.c.l.b16 %v295
        %v602 = vunpack.c.h.b16 %v295
        %v603 = vunpack.c.l.b16 %v296
        %v604 = vunpack.c.h.b16 %v296
        %v605 = vunpack.c.l.b16 %v297
        %v606 = vunpack.c.h.b16 %v297
        %v607 = vunpack.c.l.b16 %v298
        %v608 = vunpack.c.h.b16 %v298
        %v609 = vunpack.c.l.b16 %v299
        %v610 = vunpack.c.h.b16 %v299
        %v611 = vunpack.c.l.b16 %v300
        %v612 = vunpack.c.h.b16 %v300
        %v613 = vunpack.c.l.b16 %v301
        %v614 = vunpack.c.h.b16 %v301
        %v615 = vunpack.c.l.b16 %v302
        %v616 = vunpack.c.h.b16 %v302
        %v617 = vunpack.c.l.b16 %v303
        %v618 = vunpack.c.h.b16 %v303
        %v619 = vunpack.c.l.b16 %v304
        %v620 = vunpack.c.h.b16 %v304
        %v621 = vunpack.c.l.b16 %v305
        %v622 = vunpack.c.h.b16 %v305
        %v623 = vunpack.c.l.b16 %v306
        %v624 = vunpack.c.h.b16 %v306
        %v625 = vunpack.c.l.b16 %v307
        %v626 = vunpack.c.h.b16 %v307
        %v627 = vunpack.c.l.b16 %v308
        %v628 = vunpack.c.h.b16 %v308
        %v629 = vunpack.c.l.b16 %v309
        %v630 = vunpack.c.h.b16 %v309
        %v631 = vunpack.c.l.b16 %v310
        %v632 = vunpack.c.h.b16 %v310
        %v633 = vunpack.c.l.b16 %v311
        %v634 = vunpack.c.h.b16 %v311
        %v635 = vunpack.c.l.b16 %v312
        %v636 = vunpack.c.h.b16 %v312
        %v637 = vunpack.c.l.b16 %v313
        %v638 = vunpack.c.h.b16 %v313
        %v639 = vunpack.c.l.b16 %v314
        %v640 = vunpack.c.h.b16 %v314
        %v641 = vunpack.c.l.b16 %v315
        %v642 = vunpack.c.h.b16 %v315
        %v643 = vunpack.c.l.b16 %v316
        %v644 = vunpack.c.h.b16 %v316
        %v645 = vunpack.c.l.b16 %v317
        %v646 = vunpack.c.h.b16 %v317
        %v647 = vunpack.c.l.b16 %v318
        %v648 = vunpack.c.h.b16 %v318
        %v649 = vunpack.c.l.b16 %v319
        %v650 = vunpack.c.h.b16 %v319
        %v651 = vunpack.c.l.b16 %v320
        %v652 = vunpack.c.h.b16 %v320
        %v653 = vunpack.c.l.b16 %v321
        %v654 = vunpack.c.h.b16 %v321
        %v655 = vunpack.c.l.b16 %v322
        %v656 = vunpack.c.h.b16 %v322
        %v657 = vunpack.c.l.b16 %v323
        %v658 = vunpack.c.h.b16 %v323
        %v659 = vunpack.c.l.b16 %v324
        %v660 = vunpack.c.h.b16 %v324
        %v661 = vunpack.c.l.b16 %v325
        %v662 = vunpack.c.h.b16 %v325
        %v663 = vunpack.c.l.b16 %v326
        %v664 = vunpack.c.h.b16 %v326
        %v665 = vunpack.c.l.b16 %v327
        %v666 = vunpack.c.h.b16 %v327
        %v667 = vunpack.c.l.b16 %v328
        %v668 = vunpack.c.h.b16 %v328
        %v669 = vunpack.c.l.b16 %v329
        %v670 = vunpack.c.h.b16 %v329
        %v671 = vunpack.c.l.b16 %v330
        %v672 = vunpack.c.h.b16 %v330
        %v673 = vunpack.c.l.b16 %v331
        %v674 = vunpack.c.h.b16 %v331
        %v675 = vunpack.c.l.b16 %v332
        %v676 = vunpack.c.h.b16 %v332
        %v677 = vunpack.c.l.b16 %v333
        %v678 = vunpack.c.h.b16 %v333
        %v679 = vunpack.c.l.b16 %v334
        %v680 = vunpack.c.h.b16 %v334
        %v681 = vunpack.c.l.b16 %v335
        %v682 = vunpack.c.h.b16 %v335
        %v683 = vunpack.c.l.b16 %v336
        %v684 = vunpack.c.h.b16 %v336
        %v685 = vunpack.c.l.b16 %v337
        %v686 = vunpack.c.h.b16 %v337
        %v687 = vunpack.c.l.b16 %v338
        %v688 = vunpack.c.h.b16 %v338
        %v689 = vunpack.c.l.b16 %v339
        %v690 = vunpack.c.h.b16 %v339
        %v691 = vunpack.c.l.b16 %v340
        %v692 = vunpack.c.h.b16 %v340
        %v693 = vunpack.c.l.b16 %v341
        %v694 = vunpack.c.h.b16 %v341
        %v695 = vunpack.c.l.b16 %v342
        %v696 = vunpack.c.h.b16 %v342
        %v697 = vunpack.c.l.b16 %v343
        %v698 = vunpack.c.h.b16 %v343
        %v699 = vunpack.c.l.b16 %v344
        %v700 = vunpack.c.h.b16 %v344
        %v701 = vunpack.c.l.b16 %v345
        %v702 = vunpack.c.h.b16 %v345
        %v703 = vunpack.c.l.b16 %v346
        %v704 = vunpack.c.h.b16 %v346
        %v705 = vunpack.c.l.b16 %v347
        %v706 = vunpack.c.h.b16 %v347
        %v707 = vunpack.c.l.b16 %v348
        %v708 = vunpack.c.h.b16 %v348
        %v709 = vunpack.c.l.b16 %v349
        %v710 = vunpack.c.h.b16 %v349
        %v711 = vunpack.c.l.b16 %v350
        %v712 = vunpack.c.h.b16 %v350
        %v713 = vunpack.c.l.b16 %v351
        %v714 = vunpack.c.h.b16 %v351
        %v715 = vunpack.c.l.b16 %v352
        %v716 = vunpack.c.h.b16 %v352
        %v717 = vunpack.c.l.b16 %v353
        %v718 = vunpack.c.h.b16 %v353
        %v719 = vunpack.c.l.b16 %v354
        %v720 = vunpack.c.h.b16 %v354
        %v721 = vunpack.c.l.b16 %v355
        %v722 = vunpack.c.h.b16 %v355
        %v723 = vunpack.c.l.b16 %v356
        %v724 = vunpack.c.h.b16 %v356
        %v725 = vunpack.c.l.b16 %v357
        %v726 = vunpack.c.h.b16 %v357
        %v727 = vunpack.c.l.b16 %v358
        %v728 = vunpack.c.h.b16 %v358
        %v729 = vunpack.c.l.b16 %v359
        %v730 = vunpack.c.h.b16 %v359
        %v731 = vunpack.c.l.b16 %v360
        %v732 = vunpack.c.h.b16 %v360
        %v733 = vunpack.c.l.b16 %v361
        %v734 = vunpack.c.h.b16 %v361
        %v735 = vunpack.c.l.b16 %v362
        %v736 = vunpack.c.h.b16 %v362
        %v737 = vunpack.c.l.b16 %v363
        %v738 = vunpack.c.h.b16 %v363
        %v739 = vunpack.c.l.b16 %v364
        %v740 = vunpack.c.h.b16 %v364
        %v741 = vunpack.c.l.b16 %v365
        %v742 = vunpack.c.h.b16 %v365
        %v743 = vunpack.c.l.b16 %v366
        %v744 = vunpack.c.h.b16 %v366
        %v745 = vunpack.c.l.b16 %v367
        %v746 = vunpack.c.h.b16 %v367
        %v747 = vunpack.c.l.b16 %v368
        %v748 = vunpack.c.h.b16 %v368
        %v749 = vunpack.c.l.b16 %v369
        %v750 = vunpack.c.h.b16 %v369
        %v751 = vunpack.c.l.b16 %v370
        %v752 = vunpack.c.h.b16 %v370
        %v753 = vunpack.c.l.b16 %v371
        %v754 = vunpack.c.h.b16 %v371
        %v755 = vunpack.c.l.b16 %v372
        %v756 = vunpack.c.h.b16 %v372
        %v757 = vunpack.c.l.b16 %v373
        %v758 = vunpack.c.h.b16 %v373
        %v759 = vunpack.c.l.b16 %v374
        %v760 = vunpack.c.h.b16 %v374
        %v761 = vunpack.c.l.b16 %v375
        %v762 = vunpack.c.h.b16 %v375
        %v763 = vunpack.c.l.b16 %v376
        %v764 = vunpack.c.h.b16 %v376
        %v765 = vunpack.c.l.b16 %v377
        %v766 = vunpack.c.h.b16 %v377
        %v767 = vunpack.c.l.b16 %v378
        %v768 = vunpack.c.h.b16 %v378
        %v769 = vunpack.c.l.b16 %v379
        %v770 = vunpack.c.h.b16 %v379
        %v771 = vunpack.c.l.b16 %v380
        %v772 = vunpack.c.h.b16 %v380
        %v773 = vunpack.c.l.b16 %v381
        %v774 = vunpack.c.h.b16 %v381
        %v775 = vunpack.c.l.b16 %v382
        %v776 = vunpack.c.h.b16 %v382
        %v777 = vunpack.c.l.b16 %v383
        %v778 = vunpack.c.h.b16 %v383
        %v779 = vunpack.c.l.b16 %v384
        %v780 = vunpack.c.h.b16 %v384
        %v781 = vunpack.c.l.b16 %v385
        %v782 = vunpack.c.h.b16 %v385
        %v783 = vunpack.c.l.b16 %v386
        %v784 = vunpack.c.h.b16 %v386
        %v785 = vunpack.c.l.b16 %v387
        %v786 = vunpack.c.h.b16 %v387
        %v787 = vunpack.c.l.b16 %v388
        %v788 = vunpack.c.h.b16 %v388
        %v789 = vunpack.c.l.b16 %v389
        %v790 = vunpack.c.h.b16 %v389
        %v791 = vunpack.c.l.b16 %v390
        %v792 = vunpack.c.h.b16 %v390
        %v793 = vunpack.c.l.b16 %v391
        %v794 = vunpack.c.h.b16 %v391
        %v795 = vunpack.c.l.b16 %v392
        %v796 = vunpack.c.h.b16 %v392
        %v797 = vunpack.c.l.b16 %v393
        %v798 = vunpack.c.h.b16 %v393
        %v799 = vunpack.c.l.b16 %v394
        %v800 = vunpack.c.h.b16 %v394
        %v801 = vunpack.c.l.b16 %v395
        %v802 = vunpack.c.h.b16 %v395
        %v803 = vunpack.c.l.b16 %v396
        %v804 = vunpack.c.h.b16 %v396
        %v805 = vunpack.c.l.b16 %v397
        %v806 = vunpack.c.h.b16 %v397
        %v807 = vunpack.c.l.b16 %v398
        %v808 = vunpack.c.h.b16 %v398
        %v809 = vunpack.c.l.b16 %v399
        %v810 = vunpack.c.h.b16 %v399
        %v811 = vunpack.c.l.b16 %v400
        %v812 = vunpack.c.h.b16 %v400
        %v813 = vunpack.c.l.b16 %v401
        %v814 = vunpack.c.h.b16 %v401
        %v815 = vunpack.c.l.b16 %v402
        %v816 = vunpack.c.h.b16 %v402
        %v817 = vunpack.c.l.b16 %v403
        %v818 = vunpack.c.h.b16 %v403
        %v819 = vunpack.c.l.b16 %v404
        %v820 = vunpack.c.h.b16 %v404
        %v821 = vunpack.c.l.b16 %v405
        %v822 = vunpack.c.h.b16 %v405
        %v823 = vunpack.c.l.b16 %v406
        %v824 = vunpack.c.h.b16 %v406
        %v825 = vunpack.c.l.b16 %v407
        %v826 = vunpack.c.h.b16 %v407
        %v827 = vunpack.c.l.b16 %v408
        %v828 = vunpack.c.h.b16 %v408
        %v829 = vunpack.c.l.b16 %v409
        %v830 = vunpack.c.h.b16 %v409
        %v831 = vunpack.c.l.b16 %v410
        %v832 = vunpack.c.h.b16 %v410
        %v833 = vunpack.c.l.b16 %v411
        %v834 = vunpack.c.h.b16 %v411
        %v835 = vunpack.c.l.b16 %v412
        %v836 = vunpack.c.h.b16 %v412
        %v837 = vunpack.c.l.b16 %v413
        %v838 = vunpack.c.h.b16 %v413
        %v839 = vunpack.c.l.b16 %v414
        %v840 = vunpack.c.h.b16 %v414
        %v841 = vpack.c.b16 %v593, %v585
        %v842 = vpack.c.b16 %v594, %v586
        %v843 = vpack.c.b16 %v595, %v587
        %v844 = vpack.c.b16 %v596, %v588
        %v845 = vpack.c.b16 %v597, %v589
        %v846 = vpack.c.b16 %v598, %v590
        %v847 = vpack.c.b16 %v599, %v591
        %v848 = vpack.c.b16 %v600, %v592
        %v849 = vpack.c.b16 %v609, %v601
        %v850 = vpack.c.b16 %v610, %v602
        %v851 = vpack.c.b16 %v611, %v603
        %v852 = vpack.c.b16 %v612, %v604
        %v853 = vpack.c.b16 %v613, %v605
        %v854 = vpack.c.b16 %v614, %v606
        %v855 = vpack.c.b16 %v615, %v607
        %v856 = vpack.c.b16 %v616, %v608
        %v857 = vpack.c.b16 %v625, %v617
        %v858 = vpack.c.b16 %v626, %v618
        %v859 = vpack.c.b16 %v627, %v619
        %v860 = vpack.c.b16 %v628, %v620
        %v861 = vpack.c.b16 %v629, %v621
        %v862 = vpack.c.b16 %v630, %v622
        %v863 = vpack.c.b16 %v631, %v623
        %v864 = vpack.c.b16 %v632, %v624
        %v865 = vpack.c.b16 %v641, %v633
        %v866 = vpack.c.b16 %v642, %v634
        %v867 = vpack.c.b16 %v643, %v635
        %v868 = vpack.c.b16 %v644, %v636
        %v869 = vpack.c.b16 %v645, %v637
        %v870 = vpack.c.b16 %v646, %v638
        %v871 = vpack.c.b16 %v647, %v639
        %v872 = vpack.c.b16 %v648, %v640
        %v873 = vpack.c.b16 %v657, %v649
        %v874 = vpack.c.b16 %v658, %v650
        %v875 = vpack.c.b16 %v659, %v651
        %v876 = vpack.c.b16 %v660, %v652
        %v877 = vpack.c.b16 %v661, %v653
        %v878 = vpack.c.b16 %v662, %v654
        %v879 = vpack.c.b16 %v663, %v655
        %v880 = vpack.c.b16 %v664, %v656
        %v881 = vpack.c.b16 %v673, %v665
        %v882 = vpack.c.b16 %v674, %v666
        %v883 = vpack.c.b16 %v675, %v667
        %v884 = vpack.c.b16 %v676, %v668
        %v885 = vpack.c.b16 %v677, %v669
        %v886 = vpack.c.b16 %v678, %v670
        %v887 = vpack.c.b16 %v679, %v671
        %v888 = vpack.c.b16 %v680, %v672
        %v889 = vpack.c.b16 %v689, %v681
        %v890 = vpack.c.b16 %v690, %v682
        %v891 = vpack.c.b16 %v691, %v683
        %v892 = vpack.c.b16 %v692, %v684
        %v893 = vpack.c.b16 %v693, %v685
        %v894 = vpack.c.b16 %v694, %v686
        %v895 = vpack.c.b16 %v695, %v687
        %v896 = vpack.c.b16 %v696, %v688
        %v897 = vpack.c.b16 %v705, %v697
        %v898 = vpack.c.b16 %v706, %v698
        %v899 = vpack.c.b16 %v707, %v699
        %v900 = vpack.c.b16 %v708, %v700
        %v901 = vpack.c.b16 %v709, %v701
        %v902 = vpack.c.b16 %v710, %v702
        %v903 = vpack.c.b16 %v711, %v703
        %v904 = vpack.c.b16 %v712, %v704
        %v905 = vpack.c.b16 %v721, %v713
        %v906 = vpack.c.b16 %v722, %v714
        %v907 = vpack.c.b16 %v723, %v715
        %v908 = vpack.c.b16 %v724, %v716
        %v909 = vpack.c.b16 %v725, %v717
        %v910 = vpack.c.b16 %v726, %v718
        %v911 = vpack.c.b16 %v727, %v719
        %v912 = vpack.c.b16 %v728, %v720
        %v913 = vpack.c.b16 %v737, %v729
        %v914 = vpack.c.b16 %v738, %v730
        %v915 = vpack.c.b16 %v739, %v731
        %v916 = vpack.c.b16 %v740, %v732
        %v917 = vpack.c.b16 %v741, %v733
        %v918 = vpack.c.b16 %v742, %v734
        %v919 = vpack.c.b16 %v743, %v735
        %v920 = vpack.c.b16 %v744, %v736
        %v921 = vpack.c.b16 %v753, %v745
        %v922 = vpack.c.b16 %v754, %v746
        %v923 = vpack.c.b16 %v755, %v747
        %v924 = vpack.c.b16 %v756, %v748
        %v925 = vpack.c.b16 %v757, %v749
        %v926 = vpack.c.b16 %v758, %v750
        %v927 = vpack.c.b16 %v759, %v751
        %v928 = vpack.c.b16 %v760, %v752
        %v929 = vpack.c.b16 %v769, %v761
        %v930 = vpack.c.b16 %v770, %v762
        %v931 = vpack.c.b16 %v771, %v763
        %v932 = vpack.c.b16 %v772, %v764
        %v933 = vpack.c.b16 %v773, %v765
        %v934 = vpack.c.b16 %v774, %v766
        %v935 = vpack.c.b16 %v775, %v767
        %v936 = vpack.c.b16 %v776, %v768
        %v937 = vpack.c.b16 %v785, %v777
        %v938 = vpack.c.b16 %v786, %v778
        %v939 = vpack.c.b16 %v787, %v779
        %v940 = vpack.c.b16 %v788, %v780
        %v941 = vpack.c.b16 %v789, %v781
        %v942 = vpack.c.b16 %v790, %v782
        %v943 = vpack.c.b16 %v791, %v783
        %v944 = vpack.c.b16 %v792, %v784
        %v945 = vpack.c.b16 %v801, %v793
        %v946 = vpack.c.b16 %v802, %v794
        %v947 = vpack.c.b16 %v803, %v795
        %v948 = vpack.c.b16 %v804, %v796
        %v949 = vpack.c.b16 %v805, %v797
        %v950 = vpack.c.b16 %v806, %v798
        %v951 = vpack.c.b16 %v807, %v799
        %v952 = vpack.c.b16 %v808, %v800
        %v953 = vpack.c.b16 %v817, %v809
        %v954 = vpack.c.b16 %v818, %v810
        %v955 = vpack.c.b16 %v819, %v811
        %v956 = vpack.c.b16 %v820, %v812
        %v957 = vpack.c.b16 %v821, %v813
        %v958 = vpack.c.b16 %v822, %v814
        %v959 = vpack.c.b16 %v823, %v815
        %v960 = vpack.c.b16 %v824, %v816
        %v961 = vpack.c.b16 %v833, %v825
        %v962 = vpack.c.b16 %v834, %v826
        %v963 = vpack.c.b16 %v835, %v827
        %v964 = vpack.c.b16 %v836, %v828
        %v965 = vpack.c.b16 %v837, %v829
        %v966 = vpack.c.b16 %v838, %v830
        %v967 = vpack.c.b16 %v839, %v831
        %v968 = vpack.c.b16 %v840, %v832
        %1097 = vmatprep.subr.bf16.mxu0 %v898
        %1098 = vmatpush1.bf16.msra.mxu0 %v897
        %1099 = vmatprep.subr.bf16.mxu0 %v890
        %1100 = vmatpush1.bf16.msra.mxu0 %v889
        %1101 = vmatprep.subr.bf16.mxu0 %v882
        %1102 = vmatpush1.bf16.msra.mxu0 %v881
        %1103 = vmatprep.subr.bf16.mxu0 %v874
        %1104 = vmatpush1.bf16.msra.mxu0 %v873
        %1105 = vmatprep.subr.bf16.mxu0 %v866
        %1106 = vmatpush1.bf16.msra.mxu0 %v865
        %1107 = vmatprep.subr.bf16.mxu0 %v858
        %1108 = vmatpush1.bf16.msra.mxu0 %v857
        %1109 = vmatprep.subr.bf16.mxu0 %v850
        %1110 = vmatpush1.bf16.msra.mxu0 %v849
        %1111 = vmatprep.subr.bf16.mxu0 %v842
        %1112 = vmatpush1.bf16.msra.mxu0 %v841
        %1113 = vmatprep.subr.bf16.mxu0 %v962
        %1114 = vmatpush2.bf16.msra.mxu0 %v961
        %1115 = vmatprep.subr.bf16.mxu0 %v954
        %1116 = vmatpush2.bf16.msra.mxu0 %v953
        %1117 = vmatprep.subr.bf16.mxu0 %v946
        %1118 = vmatpush2.bf16.msra.mxu0 %v945
        %1119 = vmatprep.subr.bf16.mxu0 %v938
        %1120 = vmatpush2.bf16.msra.mxu0 %v937
        %1121 = vmatprep.subr.bf16.mxu0 %v930
        %1122 = vmatpush2.bf16.msra.mxu0 %v929
        %1123 = vmatprep.subr.bf16.mxu0 %v922
        %1124 = vmatpush2.bf16.msra.mxu0 %v921
        %1125 = vmatprep.subr.bf16.mxu0 %v914
        %1126 = vmatpush2.bf16.msra.mxu0 %v913
        %1127 = vmatprep.subr.bf16.mxu0 %v906
        %1128 = vmatpush2.bf16.msra.mxu0 %v905
        %1129 = vmatprep.mubr.bf16.mxu0 %v286
        %1130 = vmatmul.mubr.bf16.gmra.mxu0 %v285
        %v1131 = vpop.f32.mrf.mxu0
        %v1132 = vadd.f32 %v420, %v1131
        %v1133 = vpop.f32.mrf.mxu0
        %v1134 = vadd.f32 %v424, %v1133
        %v1135 = vpop.f32.mrf.mxu0
        %v1136 = vpop.f32.mrf.mxu0
        %1137 = vdwg.mxu0
        %1138 = vmatprep.subr.bf16.mxu0 %v900
        %1139 = vmatpush1.bf16.msra.mxu0 %v899
        %1140 = vmatprep.subr.bf16.mxu0 %v892
        %1141 = vmatpush1.bf16.msra.mxu0 %v891
        %1142 = vmatprep.subr.bf16.mxu0 %v884
        %1143 = vmatpush1.bf16.msra.mxu0 %v883
        %1144 = vmatprep.subr.bf16.mxu0 %v876
        %1145 = vmatpush1.bf16.msra.mxu0 %v875
        %1146 = vmatprep.subr.bf16.mxu0 %v868
        %1147 = vmatpush1.bf16.msra.mxu0 %v867
        %1148 = vmatprep.subr.bf16.mxu0 %v860
        %1149 = vmatpush1.bf16.msra.mxu0 %v859
        %1150 = vmatprep.subr.bf16.mxu0 %v852
        %1151 = vmatpush1.bf16.msra.mxu0 %v851
        %1152 = vmatprep.subr.bf16.mxu0 %v844
        %1153 = vmatpush1.bf16.msra.mxu0 %v843
        %1154 = vmatprep.subr.bf16.mxu0 %v964
        %1155 = vmatpush2.bf16.msra.mxu0 %v963
        %1156 = vmatprep.subr.bf16.mxu0 %v956
        %1157 = vmatpush2.bf16.msra.mxu0 %v955
        %1158 = vmatprep.subr.bf16.mxu0 %v948
        %1159 = vmatpush2.bf16.msra.mxu0 %v947
        %1160 = vmatprep.subr.bf16.mxu0 %v940
        %1161 = vmatpush2.bf16.msra.mxu0 %v939
        %1162 = vmatprep.subr.bf16.mxu0 %v932
        %1163 = vmatpush2.bf16.msra.mxu0 %v931
        %1164 = vmatprep.subr.bf16.mxu0 %v924
        %1165 = vmatpush2.bf16.msra.mxu0 %v923
        %1166 = vmatprep.subr.bf16.mxu0 %v916
        %1167 = vmatpush2.bf16.msra.mxu0 %v915
        %1168 = vmatprep.subr.bf16.mxu0 %v908
        %1169 = vmatpush2.bf16.msra.mxu0 %v907
        %1170 = vmatprep.mubr.bf16.mxu0 %v286
        %1171 = vmatmul.mubr.bf16.gmra.mxu0 %v285
        %v1172 = vpop.f32.mrf.mxu0
        %v1173 = vadd.f32 %v428, %v1172
        %v1174 = vpop.f32.mrf.mxu0
        %v1175 = vadd.f32 %v432, %v1174
        %v1176 = vpop.f32.mrf.mxu0
        %v1177 = vpop.f32.mrf.mxu0
        %1178 = vdwg.mxu0
        %1179 = vmatprep.subr.bf16.mxu0 %v902
        %1180 = vmatpush1.bf16.msra.mxu0 %v901
        %1181 = vmatprep.subr.bf16.mxu0 %v894
        %1182 = vmatpush1.bf16.msra.mxu0 %v893
        %1183 = vmatprep.subr.bf16.mxu0 %v886
        %1184 = vmatpush1.bf16.msra.mxu0 %v885
        %1185 = vmatprep.subr.bf16.mxu0 %v878
        %1186 = vmatpush1.bf16.msra.mxu0 %v877
        %1187 = vmatprep.subr.bf16.mxu0 %v870
        %1188 = vmatpush1.bf16.msra.mxu0 %v869
        %1189 = vmatprep.subr.bf16.mxu0 %v862
        %1190 = vmatpush1.bf16.msra.mxu0 %v861
        %1191 = vmatprep.subr.bf16.mxu0 %v854
        %1192 = vmatpush1.bf16.msra.mxu0 %v853
        %1193 = vmatprep.subr.bf16.mxu0 %v846
        %1194 = vmatpush1.bf16.msra.mxu0 %v845
        %1195 = vmatprep.subr.bf16.mxu0 %v966
        %1196 = vmatpush2.bf16.msra.mxu0 %v965
        %1197 = vmatprep.subr.bf16.mxu0 %v958
        %1198 = vmatpush2.bf16.msra.mxu0 %v957
        %1199 = vmatprep.subr.bf16.mxu0 %v950
        %1200 = vmatpush2.bf16.msra.mxu0 %v949
        %1201 = vmatprep.subr.bf16.mxu0 %v942
        %1202 = vmatpush2.bf16.msra.mxu0 %v941
        %1203 = vmatprep.subr.bf16.mxu0 %v934
        %1204 = vmatpush2.bf16.msra.mxu0 %v933
        %1205 = vmatprep.subr.bf16.mxu0 %v926
        %1206 = vmatpush2.bf16.msra.mxu0 %v925
        %1207 = vmatprep.subr.bf16.mxu0 %v918
        %1208 = vmatpush2.bf16.msra.mxu0 %v917
        %1209 = vmatprep.subr.bf16.mxu0 %v910
        %1210 = vmatpush2.bf16.msra.mxu0 %v909
        %1211 = vmatprep.mubr.bf16.mxu0 %v286
        %1212 = vmatmul.mubr.bf16.gmra.mxu0 %v285
        %v1213 = vpop.f32.mrf.mxu0
        %v1214 = vadd.f32 %v436, %v1213
        %v1215 = vpop.f32.mrf.mxu0
        %v1216 = vadd.f32 %v440, %v1215
        %v1217 = vpop.f32.mrf.mxu0
        %v1218 = vpop.f32.mrf.mxu0
        %1219 = vdwg.mxu0
        %1220 = vmatprep.subr.bf16.mxu0 %v904
        %1221 = vmatpush1.bf16.msra.mxu0 %v903
        %1222 = vmatprep.subr.bf16.mxu0 %v896
        %1223 = vmatpush1.bf16.msra.mxu0 %v895
        %1224 = vmatprep.subr.bf16.mxu0 %v888
        %1225 = vmatpush1.bf16.msra.mxu0 %v887
        %1226 = vmatprep.subr.bf16.mxu0 %v880
        %1227 = vmatpush1.bf16.msra.mxu0 %v879
        %1228 = vmatprep.subr.bf16.mxu0 %v872
        %1229 = vmatpush1.bf16.msra.mxu0 %v871
        %1230 = vmatprep.subr.bf16.mxu0 %v864
        %1231 = vmatpush1.bf16.msra.mxu0 %v863
        %1232 = vmatprep.subr.bf16.mxu0 %v856
        %1233 = vmatpush1.bf16.msra.mxu0 %v855
        %1234 = vmatprep.subr.bf16.mxu0 %v848
        %1235 = vmatpush1.bf16.msra.mxu0 %v847
        %1236 = vmatprep.subr.bf16.mxu0 %v968
        %1237 = vmatpush2.bf16.msra.mxu0 %v967
        %1238 = vmatprep.subr.bf16.mxu0 %v960
        %1239 = vmatpush2.bf16.msra.mxu0 %v959
        %1240 = vmatprep.subr.bf16.mxu0 %v952
        %1241 = vmatpush2.bf16.msra.mxu0 %v951
        %1242 = vmatprep.subr.bf16.mxu0 %v944
        %1243 = vmatpush2.bf16.msra.mxu0 %v943
        %1244 = vmatprep.subr.bf16.mxu0 %v936
        %1245 = vmatpush2.bf16.msra.mxu0 %v935
        %1246 = vmatprep.subr.bf16.mxu0 %v928
        %1247 = vmatpush2.bf16.msra.mxu0 %v927
        %1248 = vmatprep.subr.bf16.mxu0 %v920
        %1249 = vmatpush2.bf16.msra.mxu0 %v919
        %1250 = vmatprep.subr.bf16.mxu0 %v912
        %1251 = vmatpush2.bf16.msra.mxu0 %v911
        %1252 = vmatprep.mubr.bf16.mxu0 %v286
        %1253 = vmatmul.mubr.bf16.gmra.mxu0 %v285
        %v1254 = vpop.f32.mrf.mxu0
        %v1255 = vadd.f32 %v444, %v1254
        %v1256 = vpop.f32.mrf.mxu0
        %v1257 = vadd.f32 %v448, %v1256
        %v1258 = vpop.f32.mrf.mxu0
        %v1259 = vpop.f32.mrf.mxu0
        %1260 = vdwg.mxu0
        %v1261 = vmax.f32 %v1132, 0.0
        %v1262 = vmax.f32 %v1134, 0.0
        %v1263 = vmax.f32 %v1173, 0.0
        %v1264 = vmax.f32 %v1175, 0.0
        %v1265 = vmax.f32 %v1214, 0.0
        %v1266 = vmax.f32 %v1216, 0.0
        %v1267 = vmax.f32 %v1255, 0.0
        %v1268 = vmax.f32 %v1257, 0.0
        %v1269 = vpack.c.bf16 %v1261, %v1261
        %v1270 = vpack.c.bf16 %v1262, %v1262
        %v1271 = vpack.c.bf16 %v1263, %v1263
        %v1272 = vpack.c.bf16 %v1264, %v1264
        %v1273 = vpack.c.bf16 %v1265, %v1265
        %v1274 = vpack.c.bf16 %v1266, %v1266
        %v1275 = vpack.c.bf16 %v1267, %v1267
        %v1276 = vpack.c.bf16 %v1268, %v1268
        %v1277 = vld [vmem:[#allocation8] sm:$0xff]
        %v1278 = vld [vmem:[#allocation8 + $0x8] sm:$0xff]
        %v1279 = vld [vmem:[#allocation8 + $0x10] sm:$0xff]
        %v1280 = vld [vmem:[#allocation8 + $0x18] sm:$0xff]
        %v1281 = vld [vmem:[#allocation8 + $0x20] sm:$0xff]
        %v1282 = vld [vmem:[#allocation8 + $0x28] sm:$0xff]
        %v1283 = vld [vmem:[#allocation8 + $0x30] sm:$0xff]
        %v1284 = vld [vmem:[#allocation8 + $0x38] sm:$0xff]
        %v1285 = vld [vmem:[#allocation8 + $0x40] sm:$0xff]
        %v1286 = vld [vmem:[#allocation8 + $0x48] sm:$0xff]
        %v1287 = vld [vmem:[#allocation8 + $0x50] sm:$0xff]
        %v1288 = vld [vmem:[#allocation8 + $0x58] sm:$0xff]
        %v1289 = vld [vmem:[#allocation8 + $0x60] sm:$0xff]
        %v1290 = vld [vmem:[#allocation8 + $0x68] sm:$0xff]
        %v1291 = vld [vmem:[#allocation8 + $0x70] sm:$0xff]
        %v1292 = vld [vmem:[#allocation8 + $0x78] sm:$0xff]
        %v1293 = vld [vmem:[#allocation8 + $0x80] sm:$0xff]
        %v1294 = vld [vmem:[#allocation8 + $0x88] sm:$0xff]
        %v1295 = vld [vmem:[#allocation8 + $0x90] sm:$0xff]
        %v1296 = vld [vmem:[#allocation8 + $0x98] sm:$0xff]
        %v1297 = vld [vmem:[#allocation8 + $0xa0] sm:$0xff]
        %v1298 = vld [vmem:[#allocation8 + $0xa8] sm:$0xff]
        %v1299 = vld [vmem:[#allocation8 + $0xb0] sm:$0xff]
        %v1300 = vld [vmem:[#allocation8 + $0xb8] sm:$0xff]
        %v1301 = vld [vmem:[#allocation8 + $0xc0] sm:$0xff]
        %v1302 = vld [vmem:[#allocation8 + $0xc8] sm:$0xff]
        %v1303 = vld [vmem:[#allocation8 + $0xd0] sm:$0xff]
        %v1304 = vld [vmem:[#allocation8 + $0xd8] sm:$0xff]
        %v1305 = vld [vmem:[#allocation8 + $0xe0] sm:$0xff]
        %v1306 = vld [vmem:[#allocation8 + $0xe8] sm:$0xff]
        %v1307 = vld [vmem:[#allocation8 + $0xf0] sm:$0xff]
        %v1308 = vld [vmem:[#allocation8 + $0xf8] sm:$0xff]
        %v1309 = vld [vmem:[#allocation8 + $0x100] sm:$0xff]
        %v1310 = vld [vmem:[#allocation8 + $0x108] sm:$0xff]
        %v1311 = vld [vmem:[#allocation8 + $0x110] sm:$0xff]
        %v1312 = vld [vmem:[#allocation8 + $0x118] sm:$0xff]
        %v1313 = vld [vmem:[#allocation8 + $0x120] sm:$0xff]
        %v1314 = vld [vmem:[#allocation8 + $0x128] sm:$0xff]
        %v1315 = vld [vmem:[#allocation8 + $0x130] sm:$0xff]
        %v1316 = vld [vmem:[#allocation8 + $0x138] sm:$0xff]
        %v1317 = vld [vmem:[#allocation8 + $0x140] sm:$0xff]
        %v1318 = vld [vmem:[#allocation8 + $0x148] sm:$0xff]
        %v1319 = vld [vmem:[#allocation8 + $0x150] sm:$0xff]
        %v1320 = vld [vmem:[#allocation8 + $0x158] sm:$0xff]
        %v1321 = vld [vmem:[#allocation8 + $0x160] sm:$0xff]
        %v1322 = vld [vmem:[#allocation8 + $0x168] sm:$0xff]
        %v1323 = vld [vmem:[#allocation8 + $0x170] sm:$0xff]
        %v1324 = vld [vmem:[#allocation8 + $0x178] sm:$0xff]
        %v1325 = vld [vmem:[#allocation8 + $0x180] sm:$0xff]
        %v1326 = vld [vmem:[#allocation8 + $0x188] sm:$0xff]
        %v1327 = vld [vmem:[#allocation8 + $0x190] sm:$0xff]
        %v1328 = vld [vmem:[#allocation8 + $0x198] sm:$0xff]
        %v1329 = vld [vmem:[#allocation8 + $0x1a0] sm:$0xff]
        %v1330 = vld [vmem:[#allocation8 + $0x1a8] sm:$0xff]
        %v1331 = vld [vmem:[#allocation8 + $0x1b0] sm:$0xff]
        %v1332 = vld [vmem:[#allocation8 + $0x1b8] sm:$0xff]
        %v1333 = vld [vmem:[#allocation8 + $0x1c0] sm:$0xff]
        %v1334 = vld [vmem:[#allocation8 + $0x1c8] sm:$0xff]
        %v1335 = vld [vmem:[#allocation8 + $0x1d0] sm:$0xff]
        %v1336 = vld [vmem:[#allocation8 + $0x1d8] sm:$0xff]
        %v1337 = vld [vmem:[#allocation8 + $0x1e0] sm:$0xff]
        %v1338 = vld [vmem:[#allocation8 + $0x1e8] sm:$0xff]
        %v1339 = vld [vmem:[#allocation8 + $0x1f0] sm:$0xff]
        %v1340 = vld [vmem:[#allocation8 + $0x1f8] sm:$0xff]
        %v1341 = vld [vmem:[#allocation8 + $0x200] sm:$0xff]
        %v1342 = vld [vmem:[#allocation8 + $0x208] sm:$0xff]
        %v1343 = vld [vmem:[#allocation8 + $0x210] sm:$0xff]
        %v1344 = vld [vmem:[#allocation8 + $0x218] sm:$0xff]
        %v1345 = vld [vmem:[#allocation8 + $0x220] sm:$0xff]
        %v1346 = vld [vmem:[#allocation8 + $0x228] sm:$0xff]
        %v1347 = vld [vmem:[#allocation8 + $0x230] sm:$0xff]
        %v1348 = vld [vmem:[#allocation8 + $0x238] sm:$0xff]
        %v1349 = vld [vmem:[#allocation8 + $0x240] sm:$0xff]
        %v1350 = vld [vmem:[#allocation8 + $0x248] sm:$0xff]
        %v1351 = vld [vmem:[#allocation8 + $0x250] sm:$0xff]
        %v1352 = vld [vmem:[#allocation8 + $0x258] sm:$0xff]
        %v1353 = vld [vmem:[#allocation8 + $0x260] sm:$0xff]
        %v1354 = vld [vmem:[#allocation8 + $0x268] sm:$0xff]
        %v1355 = vld [vmem:[#allocation8 + $0x270] sm:$0xff]
        %v1356 = vld [vmem:[#allocation8 + $0x278] sm:$0xff]
        %v1357 = vld [vmem:[#allocation8 + $0x280] sm:$0xff]
        %v1358 = vld [vmem:[#allocation8 + $0x288] sm:$0xff]
        %v1359 = vld [vmem:[#allocation8 + $0x290] sm:$0xff]
        %v1360 = vld [vmem:[#allocation8 + $0x298] sm:$0xff]
        %v1361 = vld [vmem:[#allocation8 + $0x2a0] sm:$0xff]
        %v1362 = vld [vmem:[#allocation8 + $0x2a8] sm:$0xff]
        %v1363 = vld [vmem:[#allocation8 + $0x2b0] sm:$0xff]
        %v1364 = vld [vmem:[#allocation8 + $0x2b8] sm:$0xff]
        %v1365 = vld [vmem:[#allocation8 + $0x2c0] sm:$0xff]
        %v1366 = vld [vmem:[#allocation8 + $0x2c8] sm:$0xff]
        %v1367 = vld [vmem:[#allocation8 + $0x2d0] sm:$0xff]
        %v1368 = vld [vmem:[#allocation8 + $0x2d8] sm:$0xff]
        %v1369 = vld [vmem:[#allocation8 + $0x2e0] sm:$0xff]
        %v1370 = vld [vmem:[#allocation8 + $0x2e8] sm:$0xff]
        %v1371 = vld [vmem:[#allocation8 + $0x2f0] sm:$0xff]
        %v1372 = vld [vmem:[#allocation8 + $0x2f8] sm:$0xff]
        %v1373 = vld [vmem:[#allocation8 + $0x300] sm:$0xff]
        %v1374 = vld [vmem:[#allocation8 + $0x308] sm:$0xff]
        %v1375 = vld [vmem:[#allocation8 + $0x310] sm:$0xff]
        %v1376 = vld [vmem:[#allocation8 + $0x318] sm:$0xff]
        %v1377 = vld [vmem:[#allocation8 + $0x320] sm:$0xff]
        %v1378 = vld [vmem:[#allocation8 + $0x328] sm:$0xff]
        %v1379 = vld [vmem:[#allocation8 + $0x330] sm:$0xff]
        %v1380 = vld [vmem:[#allocation8 + $0x338] sm:$0xff]
        %v1381 = vld [vmem:[#allocation8 + $0x340] sm:$0xff]
        %v1382 = vld [vmem:[#allocation8 + $0x348] sm:$0xff]
        %v1383 = vld [vmem:[#allocation8 + $0x350] sm:$0xff]
        %v1384 = vld [vmem:[#allocation8 + $0x358] sm:$0xff]
        %v1385 = vld [vmem:[#allocation8 + $0x360] sm:$0xff]
        %v1386 = vld [vmem:[#allocation8 + $0x368] sm:$0xff]
        %v1387 = vld [vmem:[#allocation8 + $0x370] sm:$0xff]
        %v1388 = vld [vmem:[#allocation8 + $0x378] sm:$0xff]
        %v1389 = vld [vmem:[#allocation8 + $0x380] sm:$0xff]
        %v1390 = vld [vmem:[#allocation8 + $0x388] sm:$0xff]
        %v1391 = vld [vmem:[#allocation8 + $0x390] sm:$0xff]
        %v1392 = vld [vmem:[#allocation8 + $0x398] sm:$0xff]
        %v1393 = vld [vmem:[#allocation8 + $0x3a0] sm:$0xff]
        %v1394 = vld [vmem:[#allocation8 + $0x3a8] sm:$0xff]
        %v1395 = vld [vmem:[#allocation8 + $0x3b0] sm:$0xff]
        %v1396 = vld [vmem:[#allocation8 + $0x3b8] sm:$0xff]
        %v1397 = vld [vmem:[#allocation8 + $0x3c0] sm:$0xff]
        %v1398 = vld [vmem:[#allocation8 + $0x3c8] sm:$0xff]
        %v1399 = vld [vmem:[#allocation8 + $0x3d0] sm:$0xff]
        %v1400 = vld [vmem:[#allocation8 + $0x3d8] sm:$0xff]
        %v1401 = vld [vmem:[#allocation8 + $0x3e0] sm:$0xff]
        %v1402 = vld [vmem:[#allocation8 + $0x3e8] sm:$0xff]
        %v1403 = vld [vmem:[#allocation8 + $0x3f0] sm:$0xff]
        %v1404 = vld [vmem:[#allocation8 + $0x3f8] sm:$0xff]
        %v1405 = vld [vmem:[%s4] sm:$0x3]
        %v1407 = vlaneseq
        %v1408 = vshrl.u32 %v1407, 7
        %v1409 = vsub.s32 0, %v1408
        %v1410 = vrot.slane %v1405, %v1409
        %v1411 = vlaneseq
        %v1412 = vshrl.u32 %v1411, 7
        %v1413 = vsub.s32 1, %v1412
        %v1414 = vrot.slane %v1405, %v1413
        %v1545 = vunpack.c.l.b16 %v1277
        %v1546 = vunpack.c.h.b16 %v1277
        %v1547 = vunpack.c.l.b16 %v1278
        %v1548 = vunpack.c.h.b16 %v1278
        %v1549 = vunpack.c.l.b16 %v1279
        %v1550 = vunpack.c.h.b16 %v1279
        %v1551 = vunpack.c.l.b16 %v1280
        %v1552 = vunpack.c.h.b16 %v1280
        %v1553 = vunpack.c.l.b16 %v1281
        %v1554 = vunpack.c.h.b16 %v1281
        %v1555 = vunpack.c.l.b16 %v1282
        %v1556 = vunpack.c.h.b16 %v1282
        %v1557 = vunpack.c.l.b16 %v1283
        %v1558 = vunpack.c.h.b16 %v1283
        %v1559 = vunpack.c.l.b16 %v1284
        %v1560 = vunpack.c.h.b16 %v1284
        %v1561 = vunpack.c.l.b16 %v1285
        %v1562 = vunpack.c.h.b16 %v1285
        %v1563 = vunpack.c.l.b16 %v1286
        %v1564 = vunpack.c.h.b16 %v1286
        %v1565 = vunpack.c.l.b16 %v1287
        %v1566 = vunpack.c.h.b16 %v1287
        %v1567 = vunpack.c.l.b16 %v1288
        %v1568 = vunpack.c.h.b16 %v1288
        %v1569 = vunpack.c.l.b16 %v1289
        %v1570 = vunpack.c.h.b16 %v1289
        %v1571 = vunpack.c.l.b16 %v1290
        %v1572 = vunpack.c.h.b16 %v1290
        %v1573 = vunpack.c.l.b16 %v1291
        %v1574 = vunpack.c.h.b16 %v1291
        %v1575 = vunpack.c.l.b16 %v1292
        %v1576 = vunpack.c.h.b16 %v1292
        %v1577 = vunpack.c.l.b16 %v1293
        %v1578 = vunpack.c.h.b16 %v1293
        %v1579 = vunpack.c.l.b16 %v1294
        %v1580 = vunpack.c.h.b16 %v1294
        %v1581 = vunpack.c.l.b16 %v1295
        %v1582 = vunpack.c.h.b16 %v1295
        %v1583 = vunpack.c.l.b16 %v1296
        %v1584 = vunpack.c.h.b16 %v1296
        %v1585 = vunpack.c.l.b16 %v1297
        %v1586 = vunpack.c.h.b16 %v1297
        %v1587 = vunpack.c.l.b16 %v1298
        %v1588 = vunpack.c.h.b16 %v1298
        %v1589 = vunpack.c.l.b16 %v1299
        %v1590 = vunpack.c.h.b16 %v1299
        %v1591 = vunpack.c.l.b16 %v1300
        %v1592 = vunpack.c.h.b16 %v1300
        %v1593 = vunpack.c.l.b16 %v1301
        %v1594 = vunpack.c.h.b16 %v1301
        %v1595 = vunpack.c.l.b16 %v1302
        %v1596 = vunpack.c.h.b16 %v1302
        %v1597 = vunpack.c.l.b16 %v1303
        %v1598 = vunpack.c.h.b16 %v1303
        %v1599 = vunpack.c.l.b16 %v1304
        %v1600 = vunpack.c.h.b16 %v1304
        %v1601 = vunpack.c.l.b16 %v1305
        %v1602 = vunpack.c.h.b16 %v1305
        %v1603 = vunpack.c.l.b16 %v1306
        %v1604 = vunpack.c.h.b16 %v1306
        %v1605 = vunpack.c.l.b16 %v1307
        %v1606 = vunpack.c.h.b16 %v1307
        %v1607 = vunpack.c.l.b16 %v1308
        %v1608 = vunpack.c.h.b16 %v1308
        %v1609 = vunpack.c.l.b16 %v1309
        %v1610 = vunpack.c.h.b16 %v1309
        %v1611 = vunpack.c.l.b16 %v1310
        %v1612 = vunpack.c.h.b16 %v1310
        %v1613 = vunpack.c.l.b16 %v1311
        %v1614 = vunpack.c.h.b16 %v1311
        %v1615 = vunpack.c.l.b16 %v1312
        %v1616 = vunpack.c.h.b16 %v1312
        %v1617 = vunpack.c.l.b16 %v1313
        %v1618 = vunpack.c.h.b16 %v1313
        %v1619 = vunpack.c.l.b16 %v1314
        %v1620 = vunpack.c.h.b16 %v1314
        %v1621 = vunpack.c.l.b16 %v1315
        %v1622 = vunpack.c.h.b16 %v1315
        %v1623 = vunpack.c.l.b16 %v1316
        %v1624 = vunpack.c.h.b16 %v1316
        %v1625 = vunpack.c.l.b16 %v1317
        %v1626 = vunpack.c.h.b16 %v1317
        %v1627 = vunpack.c.l.b16 %v1318
        %v1628 = vunpack.c.h.b16 %v1318
        %v1629 = vunpack.c.l.b16 %v1319
        %v1630 = vunpack.c.h.b16 %v1319
        %v1631 = vunpack.c.l.b16 %v1320
        %v1632 = vunpack.c.h.b16 %v1320
        %v1633 = vunpack.c.l.b16 %v1321
        %v1634 = vunpack.c.h.b16 %v1321
        %v1635 = vunpack.c.l.b16 %v1322
        %v1636 = vunpack.c.h.b16 %v1322
        %v1637 = vunpack.c.l.b16 %v1323
        %v1638 = vunpack.c.h.b16 %v1323
        %v1639 = vunpack.c.l.b16 %v1324
        %v1640 = vunpack.c.h.b16 %v1324
        %v1641 = vunpack.c.l.b16 %v1325
        %v1642 = vunpack.c.h.b16 %v1325
        %v1643 = vunpack.c.l.b16 %v1326
        %v1644 = vunpack.c.h.b16 %v1326
        %v1645 = vunpack.c.l.b16 %v1327
        %v1646 = vunpack.c.h.b16 %v1327
        %v1647 = vunpack.c.l.b16 %v1328
        %v1648 = vunpack.c.h.b16 %v1328
        %v1649 = vunpack.c.l.b16 %v1329
        %v1650 = vunpack.c.h.b16 %v1329
        %v1651 = vunpack.c.l.b16 %v1330
        %v1652 = vunpack.c.h.b16 %v1330
        %v1653 = vunpack.c.l.b16 %v1331
        %v1654 = vunpack.c.h.b16 %v1331
        %v1655 = vunpack.c.l.b16 %v1332
        %v1656 = vunpack.c.h.b16 %v1332
        %v1657 = vunpack.c.l.b16 %v1333
        %v1658 = vunpack.c.h.b16 %v1333
        %v1659 = vunpack.c.l.b16 %v1334
        %v1660 = vunpack.c.h.b16 %v1334
        %v1661 = vunpack.c.l.b16 %v1335
        %v1662 = vunpack.c.h.b16 %v1335
        %v1663 = vunpack.c.l.b16 %v1336
        %v1664 = vunpack.c.h.b16 %v1336
        %v1665 = vunpack.c.l.b16 %v1337
        %v1666 = vunpack.c.h.b16 %v1337
        %v1667 = vunpack.c.l.b16 %v1338
        %v1668 = vunpack.c.h.b16 %v1338
        %v1669 = vunpack.c.l.b16 %v1339
        %v1670 = vunpack.c.h.b16 %v1339
        %v1671 = vunpack.c.l.b16 %v1340
        %v1672 = vunpack.c.h.b16 %v1340
        %v1673 = vunpack.c.l.b16 %v1341
        %v1674 = vunpack.c.h.b16 %v1341
        %v1675 = vunpack.c.l.b16 %v1342
        %v1676 = vunpack.c.h.b16 %v1342
        %v1677 = vunpack.c.l.b16 %v1343
        %v1678 = vunpack.c.h.b16 %v1343
        %v1679 = vunpack.c.l.b16 %v1344
        %v1680 = vunpack.c.h.b16 %v1344
        %v1681 = vunpack.c.l.b16 %v1345
        %v1682 = vunpack.c.h.b16 %v1345
        %v1683 = vunpack.c.l.b16 %v1346
        %v1684 = vunpack.c.h.b16 %v1346
        %v1685 = vunpack.c.l.b16 %v1347
        %v1686 = vunpack.c.h.b16 %v1347
        %v1687 = vunpack.c.l.b16 %v1348
        %v1688 = vunpack.c.h.b16 %v1348
        %v1689 = vunpack.c.l.b16 %v1349
        %v1690 = vunpack.c.h.b16 %v1349
        %v1691 = vunpack.c.l.b16 %v1350
        %v1692 = vunpack.c.h.b16 %v1350
        %v1693 = vunpack.c.l.b16 %v1351
        %v1694 = vunpack.c.h.b16 %v1351
        %v1695 = vunpack.c.l.b16 %v1352
        %v1696 = vunpack.c.h.b16 %v1352
        %v1697 = vunpack.c.l.b16 %v1353
        %v1698 = vunpack.c.h.b16 %v1353
        %v1699 = vunpack.c.l.b16 %v1354
        %v1700 = vunpack.c.h.b16 %v1354
        %v1701 = vunpack.c.l.b16 %v1355
        %v1702 = vunpack.c.h.b16 %v1355
        %v1703 = vunpack.c.l.b16 %v1356
        %v1704 = vunpack.c.h.b16 %v1356
        %v1705 = vunpack.c.l.b16 %v1357
        %v1706 = vunpack.c.h.b16 %v1357
        %v1707 = vunpack.c.l.b16 %v1358
        %v1708 = vunpack.c.h.b16 %v1358
        %v1709 = vunpack.c.l.b16 %v1359
        %v1710 = vunpack.c.h.b16 %v1359
        %v1711 = vunpack.c.l.b16 %v1360
        %v1712 = vunpack.c.h.b16 %v1360
        %v1713 = vunpack.c.l.b16 %v1361
        %v1714 = vunpack.c.h.b16 %v1361
        %v1715 = vunpack.c.l.b16 %v1362
        %v1716 = vunpack.c.h.b16 %v1362
        %v1717 = vunpack.c.l.b16 %v1363
        %v1718 = vunpack.c.h.b16 %v1363
        %v1719 = vunpack.c.l.b16 %v1364
        %v1720 = vunpack.c.h.b16 %v1364
        %v1721 = vunpack.c.l.b16 %v1365
        %v1722 = vunpack.c.h.b16 %v1365
        %v1723 = vunpack.c.l.b16 %v1366
        %v1724 = vunpack.c.h.b16 %v1366
        %v1725 = vunpack.c.l.b16 %v1367
        %v1726 = vunpack.c.h.b16 %v1367
        %v1727 = vunpack.c.l.b16 %v1368
        %v1728 = vunpack.c.h.b16 %v1368
        %v1729 = vunpack.c.l.b16 %v1369
        %v1730 = vunpack.c.h.b16 %v1369
        %v1731 = vunpack.c.l.b16 %v1370
        %v1732 = vunpack.c.h.b16 %v1370
        %v1733 = vunpack.c.l.b16 %v1371
        %v1734 = vunpack.c.h.b16 %v1371
        %v1735 = vunpack.c.l.b16 %v1372
        %v1736 = vunpack.c.h.b16 %v1372
        %v1737 = vunpack.c.l.b16 %v1373
        %v1738 = vunpack.c.h.b16 %v1373
        %v1739 = vunpack.c.l.b16 %v1374
        %v1740 = vunpack.c.h.b16 %v1374
        %v1741 = vunpack.c.l.b16 %v1375
        %v1742 = vunpack.c.h.b16 %v1375
        %v1743 = vunpack.c.l.b16 %v1376
        %v1744 = vunpack.c.h.b16 %v1376
        %v1745 = vunpack.c.l.b16 %v1377
        %v1746 = vunpack.c.h.b16 %v1377
        %v1747 = vunpack.c.l.b16 %v1378
        %v1748 = vunpack.c.h.b16 %v1378
        %v1749 = vunpack.c.l.b16 %v1379
        %v1750 = vunpack.c.h.b16 %v1379
        %v1751 = vunpack.c.l.b16 %v1380
        %v1752 = vunpack.c.h.b16 %v1380
        %v1753 = vunpack.c.l.b16 %v1381
        %v1754 = vunpack.c.h.b16 %v1381
        %v1755 = vunpack.c.l.b16 %v1382
        %v1756 = vunpack.c.h.b16 %v1382
        %v1757 = vunpack.c.l.b16 %v1383
        %v1758 = vunpack.c.h.b16 %v1383
        %v1759 = vunpack.c.l.b16 %v1384
        %v1760 = vunpack.c.h.b16 %v1384
        %v1761 = vunpack.c.l.b16 %v1385
        %v1762 = vunpack.c.h.b16 %v1385
        %v1763 = vunpack.c.l.b16 %v1386
        %v1764 = vunpack.c.h.b16 %v1386
        %v1765 = vunpack.c.l.b16 %v1387
        %v1766 = vunpack.c.h.b16 %v1387
        %v1767 = vunpack.c.l.b16 %v1388
        %v1768 = vunpack.c.h.b16 %v1388
        %v1769 = vunpack.c.l.b16 %v1389
        %v1770 = vunpack.c.h.b16 %v1389
        %v1771 = vunpack.c.l.b16 %v1390
        %v1772 = vunpack.c.h.b16 %v1390
        %v1773 = vunpack.c.l.b16 %v1391
        %v1774 = vunpack.c.h.b16 %v1391
        %v1775 = vunpack.c.l.b16 %v1392
        %v1776 = vunpack.c.h.b16 %v1392
        %v1777 = vunpack.c.l.b16 %v1393
        %v1778 = vunpack.c.h.b16 %v1393
        %v1779 = vunpack.c.l.b16 %v1394
        %v1780 = vunpack.c.h.b16 %v1394
        %v1781 = vunpack.c.l.b16 %v1395
        %v1782 = vunpack.c.h.b16 %v1395
        %v1783 = vunpack.c.l.b16 %v1396
        %v1784 = vunpack.c.h.b16 %v1396
        %v1785 = vunpack.c.l.b16 %v1397
        %v1786 = vunpack.c.h.b16 %v1397
        %v1787 = vunpack.c.l.b16 %v1398
        %v1788 = vunpack.c.h.b16 %v1398
        %v1789 = vunpack.c.l.b16 %v1399
        %v1790 = vunpack.c.h.b16 %v1399
        %v1791 = vunpack.c.l.b16 %v1400
        %v1792 = vunpack.c.h.b16 %v1400
        %v1793 = vunpack.c.l.b16 %v1401
        %v1794 = vunpack.c.h.b16 %v1401
        %v1795 = vunpack.c.l.b16 %v1402
        %v1796 = vunpack.c.h.b16 %v1402
        %v1797 = vunpack.c.l.b16 %v1403
        %v1798 = vunpack.c.h.b16 %v1403
        %v1799 = vunpack.c.l.b16 %v1404
        %v1800 = vunpack.c.h.b16 %v1404
        %v1801 = vpack.c.b16 %v1547, %v1545
        %v1802 = vpack.c.b16 %v1548, %v1546
        %v1803 = vpack.c.b16 %v1551, %v1549
        %v1804 = vpack.c.b16 %v1552, %v1550
        %v1805 = vpack.c.b16 %v1555, %v1553
        %v1806 = vpack.c.b16 %v1556, %v1554
        %v1807 = vpack.c.b16 %v1559, %v1557
        %v1808 = vpack.c.b16 %v1560, %v1558
        %v1809 = vpack.c.b16 %v1563, %v1561
        %v1810 = vpack.c.b16 %v1564, %v1562
        %v1811 = vpack.c.b16 %v1567, %v1565
        %v1812 = vpack.c.b16 %v1568, %v1566
        %v1813 = vpack.c.b16 %v1571, %v1569
        %v1814 = vpack.c.b16 %v1572, %v1570
        %v1815 = vpack.c.b16 %v1575, %v1573
        %v1816 = vpack.c.b16 %v1576, %v1574
        %v1817 = vpack.c.b16 %v1579, %v1577
        %v1818 = vpack.c.b16 %v1580, %v1578
        %v1819 = vpack.c.b16 %v1583, %v1581
        %v1820 = vpack.c.b16 %v1584, %v1582
        %v1821 = vpack.c.b16 %v1587, %v1585
        %v1822 = vpack.c.b16 %v1588, %v1586
        %v1823 = vpack.c.b16 %v1591, %v1589
        %v1824 = vpack.c.b16 %v1592, %v1590
        %v1825 = vpack.c.b16 %v1595, %v1593
        %v1826 = vpack.c.b16 %v1596, %v1594
        %v1827 = vpack.c.b16 %v1599, %v1597
        %v1828 = vpack.c.b16 %v1600, %v1598
        %v1829 = vpack.c.b16 %v1603, %v1601
        %v1830 = vpack.c.b16 %v1604, %v1602
        %v1831 = vpack.c.b16 %v1607, %v1605
        %v1832 = vpack.c.b16 %v1608, %v1606
        %v1833 = vpack.c.b16 %v1611, %v1609
        %v1834 = vpack.c.b16 %v1612, %v1610
        %v1835 = vpack.c.b16 %v1615, %v1613
        %v1836 = vpack.c.b16 %v1616, %v1614
        %v1837 = vpack.c.b16 %v1619, %v1617
        %v1838 = vpack.c.b16 %v1620, %v1618
        %v1839 = vpack.c.b16 %v1623, %v1621
        %v1840 = vpack.c.b16 %v1624, %v1622
        %v1841 = vpack.c.b16 %v1627, %v1625
        %v1842 = vpack.c.b16 %v1628, %v1626
        %v1843 = vpack.c.b16 %v1631, %v1629
        %v1844 = vpack.c.b16 %v1632, %v1630
        %v1845 = vpack.c.b16 %v1635, %v1633
        %v1846 = vpack.c.b16 %v1636, %v1634
        %v1847 = vpack.c.b16 %v1639, %v1637
        %v1848 = vpack.c.b16 %v1640, %v1638
        %v1849 = vpack.c.b16 %v1643, %v1641
        %v1850 = vpack.c.b16 %v1644, %v1642
        %v1851 = vpack.c.b16 %v1647, %v1645
        %v1852 = vpack.c.b16 %v1648, %v1646
        %v1853 = vpack.c.b16 %v1651, %v1649
        %v1854 = vpack.c.b16 %v1652, %v1650
        %v1855 = vpack.c.b16 %v1655, %v1653
        %v1856 = vpack.c.b16 %v1656, %v1654
        %v1857 = vpack.c.b16 %v1659, %v1657
        %v1858 = vpack.c.b16 %v1660, %v1658
        %v1859 = vpack.c.b16 %v1663, %v1661
        %v1860 = vpack.c.b16 %v1664, %v1662
        %v1861 = vpack.c.b16 %v1667, %v1665
        %v1862 = vpack.c.b16 %v1668, %v1666
        %v1863 = vpack.c.b16 %v1671, %v1669
        %v1864 = vpack.c.b16 %v1672, %v1670
        %v1865 = vpack.c.b16 %v1675, %v1673
        %v1866 = vpack.c.b16 %v1676, %v1674
        %v1867 = vpack.c.b16 %v1679, %v1677
        %v1868 = vpack.c.b16 %v1680, %v1678
        %v1869 = vpack.c.b16 %v1683, %v1681
        %v1870 = vpack.c.b16 %v1684, %v1682
        %v1871 = vpack.c.b16 %v1687, %v1685
        %v1872 = vpack.c.b16 %v1688, %v1686
        %v1873 = vpack.c.b16 %v1691, %v1689
        %v1874 = vpack.c.b16 %v1692, %v1690
        %v1875 = vpack.c.b16 %v1695, %v1693
        %v1876 = vpack.c.b16 %v1696, %v1694
        %v1877 = vpack.c.b16 %v1699, %v1697
        %v1878 = vpack.c.b16 %v1700, %v1698
        %v1879 = vpack.c.b16 %v1703, %v1701
        %v1880 = vpack.c.b16 %v1704, %v1702
        %v1881 = vpack.c.b16 %v1707, %v1705
        %v1882 = vpack.c.b16 %v1708, %v1706
        %v1883 = vpack.c.b16 %v1711, %v1709
        %v1884 = vpack.c.b16 %v1712, %v1710
        %v1885 = vpack.c.b16 %v1715, %v1713
        %v1886 = vpack.c.b16 %v1716, %v1714
        %v1887 = vpack.c.b16 %v1719, %v1717
        %v1888 = vpack.c.b16 %v1720, %v1718
        %v1889 = vpack.c.b16 %v1723, %v1721
        %v1890 = vpack.c.b16 %v1724, %v1722
        %v1891 = vpack.c.b16 %v1727, %v1725
        %v1892 = vpack.c.b16 %v1728, %v1726
        %v1893 = vpack.c.b16 %v1731, %v1729
        %v1894 = vpack.c.b16 %v1732, %v1730
        %v1895 = vpack.c.b16 %v1735, %v1733
        %v1896 = vpack.c.b16 %v1736, %v1734
        %v1897 = vpack.c.b16 %v1739, %v1737
        %v1898 = vpack.c.b16 %v1740, %v1738
        %v1899 = vpack.c.b16 %v1743, %v1741
        %v1900 = vpack.c.b16 %v1744, %v1742
        %v1901 = vpack.c.b16 %v1747, %v1745
        %v1902 = vpack.c.b16 %v1748, %v1746
        %v1903 = vpack.c.b16 %v1751, %v1749
        %v1904 = vpack.c.b16 %v1752, %v1750
        %v1905 = vpack.c.b16 %v1755, %v1753
        %v1906 = vpack.c.b16 %v1756, %v1754
        %v1907 = vpack.c.b16 %v1759, %v1757
        %v1908 = vpack.c.b16 %v1760, %v1758
        %v1909 = vpack.c.b16 %v1763, %v1761
        %v1910 = vpack.c.b16 %v1764, %v1762
        %v1911 = vpack.c.b16 %v1767, %v1765
        %v1912 = vpack.c.b16 %v1768, %v1766
        %v1913 = vpack.c.b16 %v1771, %v1769
        %v1914 = vpack.c.b16 %v1772, %v1770
        %v1915 = vpack.c.b16 %v1775, %v1773
        %v1916 = vpack.c.b16 %v1776, %v1774
        %v1917 = vpack.c.b16 %v1779, %v1777
        %v1918 = vpack.c.b16 %v1780, %v1778
        %v1919 = vpack.c.b16 %v1783, %v1781
        %v1920 = vpack.c.b16 %v1784, %v1782
        %v1921 = vpack.c.b16 %v1787, %v1785
        %v1922 = vpack.c.b16 %v1788, %v1786
        %v1923 = vpack.c.b16 %v1791, %v1789
        %v1924 = vpack.c.b16 %v1792, %v1790
        %v1925 = vpack.c.b16 %v1795, %v1793
        %v1926 = vpack.c.b16 %v1796, %v1794
        %v1927 = vpack.c.b16 %v1799, %v1797
        %v1928 = vpack.c.b16 %v1800, %v1798
        %2057 = vmatprep.subr.bf16.mxu0 %v1816
        %2058 = vmatpush1.bf16.msra.mxu0 %v1815
        %2059 = vmatprep.subr.bf16.mxu0 %v1814
        %2060 = vmatpush1.bf16.msra.mxu0 %v1813
        %2061 = vmatprep.subr.bf16.mxu0 %v1812
        %2062 = vmatpush1.bf16.msra.mxu0 %v1811
        %2063 = vmatprep.subr.bf16.mxu0 %v1810
        %2064 = vmatpush1.bf16.msra.mxu0 %v1809
        %2065 = vmatprep.subr.bf16.mxu0 %v1808
        %2066 = vmatpush1.bf16.msra.mxu0 %v1807
        %2067 = vmatprep.subr.bf16.mxu0 %v1806
        %2068 = vmatpush1.bf16.msra.mxu0 %v1805
        %2069 = vmatprep.subr.bf16.mxu0 %v1804
        %2070 = vmatpush1.bf16.msra.mxu0 %v1803
        %2071 = vmatprep.subr.bf16.mxu0 %v1802
        %2072 = vmatpush1.bf16.msra.mxu0 %v1801
        %2073 = vmatprep.subr.bf16.mxu0 %v1832
        %2074 = vmatpush2.bf16.msra.mxu0 %v1831
        %2075 = vmatprep.subr.bf16.mxu0 %v1830
        %2076 = vmatpush2.bf16.msra.mxu0 %v1829
        %2077 = vmatprep.subr.bf16.mxu0 %v1828
        %2078 = vmatpush2.bf16.msra.mxu0 %v1827
        %2079 = vmatprep.subr.bf16.mxu0 %v1826
        %2080 = vmatpush2.bf16.msra.mxu0 %v1825
        %2081 = vmatprep.subr.bf16.mxu0 %v1824
        %2082 = vmatpush2.bf16.msra.mxu0 %v1823
        %2083 = vmatprep.subr.bf16.mxu0 %v1822
        %2084 = vmatpush2.bf16.msra.mxu0 %v1821
        %2085 = vmatprep.subr.bf16.mxu0 %v1820
        %2086 = vmatpush2.bf16.msra.mxu0 %v1819
        %2087 = vmatprep.subr.bf16.mxu0 %v1818
        %2088 = vmatpush2.bf16.msra.mxu0 %v1817
        %2089 = vmatprep.mubr.bf16.mxu0 %v1270
        %2090 = vmatmul.mubr.bf16.gmra.mxu0 %v1269
        %v2091 = vpop.f32.mrf.mxu0
        %v2092 = vadd.f32 %v1410, %v2091
        %v2093 = vpop.f32.mrf.mxu0
        %v2094 = vadd.f32 %v1414, %v2093
        %v2095 = vpop.f32.mrf.mxu0
        %v2096 = vpop.f32.mrf.mxu0
        %2097 = vdwg.mxu0
        %2098 = vmatprep.subr.bf16.mxu0 %v1848
        %2099 = vmatpush1.bf16.msra.mxu0 %v1847
        %2100 = vmatprep.subr.bf16.mxu0 %v1846
        %2101 = vmatpush1.bf16.msra.mxu0 %v1845
        %2102 = vmatprep.subr.bf16.mxu0 %v1844
        %2103 = vmatpush1.bf16.msra.mxu0 %v1843
        %2104 = vmatprep.subr.bf16.mxu0 %v1842
        %2105 = vmatpush1.bf16.msra.mxu0 %v1841
        %2106 = vmatprep.subr.bf16.mxu0 %v1840
        %2107 = vmatpush1.bf16.msra.mxu0 %v1839
        %2108 = vmatprep.subr.bf16.mxu0 %v1838
        %2109 = vmatpush1.bf16.msra.mxu0 %v1837
        %2110 = vmatprep.subr.bf16.mxu0 %v1836
        %2111 = vmatpush1.bf16.msra.mxu0 %v1835
        %2112 = vmatprep.subr.bf16.mxu0 %v1834
        %2113 = vmatpush1.bf16.msra.mxu0 %v1833
        %2114 = vmatprep.subr.bf16.mxu0 %v1864
        %2115 = vmatpush2.bf16.msra.mxu0 %v1863
        %2116 = vmatprep.subr.bf16.mxu0 %v1862
        %2117 = vmatpush2.bf16.msra.mxu0 %v1861
        %2118 = vmatprep.subr.bf16.mxu0 %v1860
        %2119 = vmatpush2.bf16.msra.mxu0 %v1859
        %2120 = vmatprep.subr.bf16.mxu0 %v1858
        %2121 = vmatpush2.bf16.msra.mxu0 %v1857
        %2122 = vmatprep.subr.bf16.mxu0 %v1856
        %2123 = vmatpush2.bf16.msra.mxu0 %v1855
        %2124 = vmatprep.subr.bf16.mxu0 %v1854
        %2125 = vmatpush2.bf16.msra.mxu0 %v1853
        %2126 = vmatprep.subr.bf16.mxu0 %v1852
        %2127 = vmatpush2.bf16.msra.mxu0 %v1851
        %2128 = vmatprep.subr.bf16.mxu0 %v1850
        %2129 = vmatpush2.bf16.msra.mxu0 %v1849
        %2130 = vmatprep.mubr.bf16.mxu0 %v1272
        %2131 = vmatmul.mubr.bf16.gmra.mxu0 %v1271
        %v2132 = vpop.f32.mrf.mxu0
        %v2133 = vadd.f32 %v2092, %v2132
        %v2134 = vpop.f32.mrf.mxu0
        %v2135 = vadd.f32 %v2094, %v2134
        %v2136 = vpop.f32.mrf.mxu0
        %v2137 = vpop.f32.mrf.mxu0
        %2138 = vdwg.mxu0
        %2139 = vmatprep.subr.bf16.mxu0 %v1880
        %2140 = vmatpush1.bf16.msra.mxu0 %v1879
        %2141 = vmatprep.subr.bf16.mxu0 %v1878
        %2142 = vmatpush1.bf16.msra.mxu0 %v1877
        %2143 = vmatprep.subr.bf16.mxu0 %v1876
        %2144 = vmatpush1.bf16.msra.mxu0 %v1875
        %2145 = vmatprep.subr.bf16.mxu0 %v1874
        %2146 = vmatpush1.bf16.msra.mxu0 %v1873
        %2147 = vmatprep.subr.bf16.mxu0 %v1872
        %2148 = vmatpush1.bf16.msra.mxu0 %v1871
        %2149 = vmatprep.subr.bf16.mxu0 %v1870
        %2150 = vmatpush1.bf16.msra.mxu0 %v1869
        %2151 = vmatprep.subr.bf16.mxu0 %v1868
        %2152 = vmatpush1.bf16.msra.mxu0 %v1867
        %2153 = vmatprep.subr.bf16.mxu0 %v1866
        %2154 = vmatpush1.bf16.msra.mxu0 %v1865
        %2155 = vmatprep.subr.bf16.mxu0 %v1896
        %2156 = vmatpush2.bf16.msra.mxu0 %v1895
        %2157 = vmatprep.subr.bf16.mxu0 %v1894
        %2158 = vmatpush2.bf16.msra.mxu0 %v1893
        %2159 = vmatprep.subr.bf16.mxu0 %v1892
        %2160 = vmatpush2.bf16.msra.mxu0 %v1891
        %2161 = vmatprep.subr.bf16.mxu0 %v1890
        %2162 = vmatpush2.bf16.msra.mxu0 %v1889
        %2163 = vmatprep.subr.bf16.mxu0 %v1888
        %2164 = vmatpush2.bf16.msra.mxu0 %v1887
        %2165 = vmatprep.subr.bf16.mxu0 %v1886
        %2166 = vmatpush2.bf16.msra.mxu0 %v1885
        %2167 = vmatprep.subr.bf16.mxu0 %v1884
        %2168 = vmatpush2.bf16.msra.mxu0 %v1883
        %2169 = vmatprep.subr.bf16.mxu0 %v1882
        %2170 = vmatpush2.bf16.msra.mxu0 %v1881
        %2171 = vmatprep.mubr.bf16.mxu0 %v1274
        %2172 = vmatmul.mubr.bf16.gmra.mxu0 %v1273
        %v2173 = vpop.f32.mrf.mxu0
        %v2174 = vadd.f32 %v2133, %v2173
        %v2175 = vpop.f32.mrf.mxu0
        %v2176 = vadd.f32 %v2135, %v2175
        %v2177 = vpop.f32.mrf.mxu0
        %v2178 = vpop.f32.mrf.mxu0
        %2179 = vdwg.mxu0
        %2180 = vmatprep.subr.bf16.mxu0 %v1912
        %2181 = vmatpush1.bf16.msra.mxu0 %v1911
        %2182 = vmatprep.subr.bf16.mxu0 %v1910
        %2183 = vmatpush1.bf16.msra.mxu0 %v1909
        %2184 = vmatprep.subr.bf16.mxu0 %v1908
        %2185 = vmatpush1.bf16.msra.mxu0 %v1907
        %2186 = vmatprep.subr.bf16.mxu0 %v1906
        %2187 = vmatpush1.bf16.msra.mxu0 %v1905
        %2188 = vmatprep.subr.bf16.mxu0 %v1904
        %2189 = vmatpush1.bf16.msra.mxu0 %v1903
        %2190 = vmatprep.subr.bf16.mxu0 %v1902
        %2191 = vmatpush1.bf16.msra.mxu0 %v1901
        %2192 = vmatprep.subr.bf16.mxu0 %v1900
        %2193 = vmatpush1.bf16.msra.mxu0 %v1899
        %2194 = vmatprep.subr.bf16.mxu0 %v1898
        %2195 = vmatpush1.bf16.msra.mxu0 %v1897
        %2196 = vmatprep.subr.bf16.mxu0 %v1928
        %2197 = vmatpush2.bf16.msra.mxu0 %v1927
        %2198 = vmatprep.subr.bf16.mxu0 %v1926
        %2199 = vmatpush2.bf16.msra.mxu0 %v1925
        %2200 = vmatprep.subr.bf16.mxu0 %v1924
        %2201 = vmatpush2.bf16.msra.mxu0 %v1923
        %2202 = vmatprep.subr.bf16.mxu0 %v1922
        %2203 = vmatpush2.bf16.msra.mxu0 %v1921
        %2204 = vmatprep.subr.bf16.mxu0 %v1920
        %2205 = vmatpush2.bf16.msra.mxu0 %v1919
        %2206 = vmatprep.subr.bf16.mxu0 %v1918
        %2207 = vmatpush2.bf16.msra.mxu0 %v1917
        %2208 = vmatprep.subr.bf16.mxu0 %v1916
        %2209 = vmatpush2.bf16.msra.mxu0 %v1915
        %2210 = vmatprep.subr.bf16.mxu0 %v1914
        %2211 = vmatpush2.bf16.msra.mxu0 %v1913
        %2212 = vmatprep.mubr.bf16.mxu0 %v1276
        %2213 = vmatmul.mubr.bf16.gmra.mxu0 %v1275
        %v2214 = vpop.f32.mrf.mxu0
        %v2215 = vadd.f32 %v2174, %v2214
        %v2216 = vpop.f32.mrf.mxu0
        %v2217 = vadd.f32 %v2176, %v2216
        %v2218 = vpop.f32.mrf.mxu0
        %v2219 = vpop.f32.mrf.mxu0
        %2220 = vdwg.mxu0
        %2221 = vst [vmem:[%s282] sm:$0xff] %v2215
        %2222 = vst [vmem:[%s282 + $0x8] sm:$0xff] %v2217
        %s2223 = sand.u32 %s142, 1
        %s2224 = scalar_lea.sflag [#allocation4], %s2223
        %s2225 = sand.u32 %s142, 1
        %s2226 = smul.addr %s2225, 16
        %s2227 = scalar_lea.vmem [#allocation10], %s2226
        // Predicated region
        $region57: #{tpu_custom_call.1} parent=39 // pred_check
          %p2228 = pneg %p152
        $region58: #{tpu_custom_call.1} parent=39 // pred_check_branch
          %2230 = sbr.rel (%p2228) target = $region60
        $region59: #{tpu_custom_call.1} parent=39 // pred_region
          %s2232 = ssub.s32 256, 256
          %2233 = vsyncadd %s2224, %s2232
          %s2234 = smul.addr %s24, 2
          %s2235 = smul.addr %s2234, 128
          %s2236 = scalar_lea.hbm %s5, %s2235
          %s2238 = sshll.u32 %s2227, 4
          %s2239 = int_to_ptr.vmem [resolvable:$true] %s2238
          %2241 = dma.vmem_to_hbm [thread:$0]  %s2239, 256, %s2236, %s2224
        $region60: #{tpu_custom_call.1} parent=39 // pred_fallthru
          _
      $region40: #{tpu_custom_call.1} parent=5 // pred_fallthru
        _
      %p2242 = scmp.le.s32.totalorder 2, %s19
      // Predicated region
      $region61: #{tpu_custom_call.1} parent=5 // pred_check
        %p2243 = pneg %p2242
      $region62: #{tpu_custom_call.1} parent=5 // pred_check_branch
        %2245 = sbr.rel (%p2243) target = $region64
      $region63: #{tpu_custom_call.1} parent=5 // pred_region
        %s2246 = ssub.s32 %s19, 2
        // Predicated region
        $region65: #{tpu_custom_call.1} parent=63 // pred_check
          %p2247 = pneg %p158
        $region66: #{tpu_custom_call.1} parent=63 // pred_check_branch
          %2249 = sbr.rel (%p2247) target = $region68
        $region67: #{tpu_custom_call.1} parent=63 // pred_region
          %s2250 = sand.u32 %s143, 1
          %s2251 = scalar_lea.sflag [#allocation4], %s2250
          %s2252 = sand.u32 %s143, 1
          %s2253 = smul.addr %s2252, 16
          %s2254 = scalar_lea.vmem [#allocation10], %s2253
          %2255 = dma.done %s2251, 256
        $region68: #{tpu_custom_call.1} parent=63 // pred_fallthru
          _
      $region64: #{tpu_custom_call.1} parent=5 // pred_fallthru
        _
    $region6: #{tpu_custom_call.1} parent=1 // loop_footer
      %s23 = sadd.s32 1, %s19
    $region7: #{tpu_custom_call.1} parent=1 // loop_footer_branch
      %18 = sbr.rel target = $region3
    $region8: #{tpu_custom_call.1} parent=1 // loop_exit
      _
    %2256 = vsyncpa [#allocation3], 1
    %s2257 = scalar_lea.sflag [#allocation3], 1
    %2258 = vsyncpa %s2257, 1
    %2259 = vsyncpa [#allocation6], 1
    %2260 = vsyncpa [#allocation9], 1
    %2261 = vsyncpa [#allocation4], 1
    %s2262 = scalar_lea.sflag [#allocation4], 1
    %2263 = vsyncpa %s2262, 1

</llo_original>
